<compile_context>
chip_gen: v7x
topology: tpu7x:2x2x1
jax: 0.10.0
libtpu: 0.0.40
codegen_flags: <defaults>
</compile_context>

<pallas_src>
import jax
import jax.numpy as jnp
from jax import lax
from jax.experimental import pallas as pl
from jax.experimental.pallas import tpu as pltpu


# -----------------------------------------------------------------------------
# Fused kernel: 2 LSTM layers + FC, one invocation per batch chunk
# -----------------------------------------------------------------------------
def _fused_lstm_fc_kernel(
    x_ref,                      # (T, Bc, I)   bf16  input slab (VMEM-resident)
    wih1_ref,                   # (I, 4H)      bf16
    whh1_ref,                   # (H, 4H)      bf16
    b1_ref,                     # (1, 4H)      f32   (b_ih1 + b_hh1)
    wih2_ref,                   # (H, 4H)      bf16
    whh2_ref,                   # (H, 4H)      bf16
    b2_ref,                     # (1, 4H)      f32   (b_ih2 + b_hh2)
    wfc_ref,                    # (H, O)       bf16
    bfc_ref,                    # (1, O)       f32
    out_ref,                    # (T, Bc, O)   f32
    gates_scr,                  # (T, Bc, 4H)  f32  scratch, reused by both layers
    hseq_scr,                   # (T, Bc, H)   f32  scratch, reused by both layers
):
    T, Bc, I = x_ref.shape
    H = whh1_ref.shape[0]
    O = wfc_ref.shape[1]

    # ---- pre-pass 1: layer-1 input projection (+ folded biases) for ALL
    #      timesteps in a single large MXU matmul (off the serial path).
    x_all = x_ref[...].reshape(T * Bc, I)
    g1 = jnp.dot(x_all, wih1_ref[...], preferred_element_type=jnp.float32) + b1_ref[...]
    gates_scr[...] = g1.reshape(T, Bc, 4 * H)

    def make_step(whh_ref):
        # One recurrence step: exactly ONE small matmul on the serial path.
        def step(t, carry):
            h, c = carry
            pre = gates_scr[t] + jnp.dot(
                h.astype(jnp.bfloat16), whh_ref[...],
                preferred_element_type=jnp.float32)
            # PyTorch gate order: input, forget, cell(g), output.
            i_g = jax.nn.sigmoid(pre[:, 0 * H:1 * H])
            f_g = jax.nn.sigmoid(pre[:, 1 * H:2 * H])
            g_g = jnp.tanh(pre[:, 2 * H:3 * H])
            o_g = jax.nn.sigmoid(pre[:, 3 * H:4 * H])
            c_new = f_g * c + i_g * g_g
            h_new = o_g * jnp.tanh(c_new)
            hseq_scr[t] = h_new
            return (h_new, c_new)
        return step

    zero_state = (jnp.zeros((Bc, H), jnp.float32),
                  jnp.zeros((Bc, H), jnp.float32))

    # ---- layer-1 recurrence (h/c live in vregs as loop carries).
    lax.fori_loop(0, T, make_step(whh1_ref), zero_state, unroll=True)

    # ---- pre-pass 2: layer-2 input projection of all layer-1 hiddens,
    #      one large matmul.  gates/hseq scratch are then safely reused.
    h1_all = hseq_scr[...].reshape(T * Bc, H).astype(jnp.bfloat16)
    g2 = jnp.dot(h1_all, wih2_ref[...], preferred_element_type=jnp.float32) + b2_ref[...]
    gates_scr[...] = g2.reshape(T, Bc, 4 * H)

    # ---- layer-2 recurrence.
    lax.fori_loop(0, T, make_step(whh2_ref), zero_state, unroll=True)

    # ---- fused FC over all timesteps: one matmul + one output store.
    h2_all = hseq_scr[...].reshape(T * Bc, H).astype(jnp.bfloat16)
    y = jnp.dot(h2_all, wfc_ref[...], preferred_element_type=jnp.float32) + bfc_ref[...]
    out_ref[...] = y.reshape(T, Bc, O).astype(out_ref.dtype)


# -----------------------------------------------------------------------------
# Wrapper: matches PyTorch LSTM.forward (batch_first) semantics
# -----------------------------------------------------------------------------
def lstm_module_forward(x_bti, params, *, batch_chunk=None):
    """x_bti: (B, T, input_size) f32. Returns (B, T, output_size) f32.

    batch_chunk: optional batch-chunk size (must divide B; if < B it must be a
    multiple of 8 for the sublane constraint). On v7x set batch_chunk=B//2 to
    shard the independent batch rows across the 2 TensorCores via the
    "parallel" grid axis.
    """
    B, T, I = x_bti.shape
    (w_ih1, w_hh1, b_ih1, b_hh1), (w_ih2, w_hh2, b_ih2, b_hh2) = params["lstm"]
    H = w_hh1.shape[1]
    O = params["fc_w"].shape[0]

    if batch_chunk is None:
        batch_chunk = B
    assert B % batch_chunk == 0
    n_chunks = B // batch_chunk

    # Time-major bf16 input for the kernel (transposes are cheap XLA ops).
    x_tbi = jnp.transpose(x_bti, (1, 0, 2)).astype(jnp.bfloat16)

    # Pre-transposed weights; bf16 for the MXU, biases folded & kept f32.
    wih1 = w_ih1.T.astype(jnp.bfloat16)                       # (I, 4H)
    whh1 = w_hh1.T.astype(jnp.bfloat16)                       # (H, 4H)
    b1 = (b_ih1 + b_hh1).reshape(1, 4 * H).astype(jnp.float32)
    wih2 = w_ih2.T.astype(jnp.bfloat16)                       # (H, 4H)
    whh2 = w_hh2.T.astype(jnp.bfloat16)                       # (H, 4H)
    b2 = (b_ih2 + b_hh2).reshape(1, 4 * H).astype(jnp.float32)
    wfc = params["fc_w"].T.astype(jnp.bfloat16)               # (H, O)
    bfc = params["fc_b"].reshape(1, O).astype(jnp.float32)

    out_tbo = pl.pallas_call(
        _fused_lstm_fc_kernel,
        out_shape=jax.ShapeDtypeStruct((T, B, O), jnp.float32),
        grid_spec=pltpu.PrefetchScalarGridSpec(
            num_scalar_prefetch=0,
            grid=(n_chunks,),
            in_specs=[
                pl.BlockSpec((T, batch_chunk, I), lambda b: (0, b, 0)),  # x slab
                pl.BlockSpec((I, 4 * H), lambda b: (0, 0)),              # W_ih1^T
                pl.BlockSpec((H, 4 * H), lambda b: (0, 0)),              # W_hh1^T
                pl.BlockSpec((1, 4 * H), lambda b: (0, 0)),              # bias1
                pl.BlockSpec((H, 4 * H), lambda b: (0, 0)),              # W_ih2^T
                pl.BlockSpec((H, 4 * H), lambda b: (0, 0)),              # W_hh2^T
                pl.BlockSpec((1, 4 * H), lambda b: (0, 0)),              # bias2
                pl.BlockSpec((H, O), lambda b: (0, 0)),                  # W_fc^T
                pl.BlockSpec((1, O), lambda b: (0, 0)),                  # b_fc
            ],
            out_specs=pl.BlockSpec((T, batch_chunk, O), lambda b: (0, b, 0)),
            scratch_shapes=[
                pltpu.VMEM((T, batch_chunk, 4 * H), jnp.float32),  # gate pre-acts
                pltpu.VMEM((T, batch_chunk, H), jnp.float32),      # hidden sequence
            ],
        ),
        compiler_params=pltpu.CompilerParams(
            dimension_semantics=("parallel",),     # batch chunks are independent
            vmem_limit_bytes=48 * 1024 * 1024,     # explicit; fits v7x's 64 MiB
        ),
    )(x_tbi, wih1, whh1, b1, wih2, whh2, b2, wfc, bfc)

    return jnp.transpose(out_tbo, (1, 0, 2))       # (B, T, O)


# -----------------------------------------------------------------------------
# Pure-JAX reference with matching bf16-matmul / f32-accumulate numerics
# -----------------------------------------------------------------------------
def lstm_module_reference(x_bti, params):
    B, T, _ = x_bti.shape

    def mm(a, b):
        return jnp.dot(a.astype(jnp.bfloat16), b.astype(jnp.bfloat16),
                       preferred_element_type=jnp.float32)

    seq = x_bti
    for (w_ih, w_hh, b_ih, b_hh) in params["lstm"]:
        H = w_hh.shape[1]
        h = jnp.zeros((B, H), jnp.float32)
        c = jnp.zeros((B, H), jnp.float32)
        bias = (b_ih + b_hh).astype(jnp.float32)
        outs = []
        for t in range(T):
            g = mm(seq[:, t, :], w_ih.T) + mm(h, w_hh.T) + bias
            i_g = jax.nn.sigmoid(g[:, 0 * H:1 * H])
            f_g = jax.nn.sigmoid(g[:, 1 * H:2 * H])
            g_g = jnp.tanh(g[:, 2 * H:3 * H])
            o_g = jax.nn.sigmoid(g[:, 3 * H:4 * H])
            c = f_g * c + i_g * g_g
            h = o_g * jnp.tanh(c)
            outs.append(h)
        seq = jnp.stack(outs, axis=1)
    H = seq.shape[-1]
    y = mm(seq.reshape(B * T, H), params["fc_w"].T) + params["fc_b"]
    return y.reshape(B, T, -1)


# -----------------------------------------------------------------------------
# Deterministic parameter init (PyTorch-style uniform(-1/sqrt(H), 1/sqrt(H)))
# -----------------------------------------------------------------------------
def init_params(key, input_size, hidden_size, num_layers, output_size):
    params = {"lstm": []}
    k_lstm = 1.0 / jnp.sqrt(hidden_size)
    for layer in range(num_layers):
        in_sz = input_size if layer == 0 else hidden_size
        key, k1, k2, k3, k4 = jax.random.split(key, 5)
        w_ih = jax.random.uniform(k1, (4 * hidden_size, in_sz), jnp.float32, -k_lstm, k_lstm)
        w_hh = jax.random.uniform(k2, (4 * hidden_size, hidden_size), jnp.float32, -k_lstm, k_lstm)
        b_ih = jax.random.uniform(k3, (4 * hidden_size,), jnp.float32, -k_lstm, k_lstm)
        b_hh = jax.random.uniform(k4, (4 * hidden_size,), jnp.float32, -k_lstm, k_lstm)
        params["lstm"].append((w_ih, w_hh, b_ih, b_hh))
    key, k5, k6 = jax.random.split(key, 3)
    k_fc = 1.0 / jnp.sqrt(hidden_size)
    params["fc_w"] = jax.random.uniform(k5, (output_size, hidden_size), jnp.float32, -k_fc, k_fc)
    params["fc_b"] = jax.random.uniform(k6, (output_size,), jnp.float32, -k_fc, k_fc)
    return params


if __name__ == "__main__":
    # Small shapes consistent with the module (hidden_size=16, num_layers=2).
    B, T, INPUT_SIZE = 8, 8, 16
    HIDDEN_SIZE, NUM_LAYERS, OUTPUT_SIZE = 16, 2, 4

    key = jax.random.PRNGKey(0)
    key, xk = jax.random.split(key)
    x = jax.random.normal(xk, (B, T, INPUT_SIZE), jnp.float32)

    params = init_params(key, INPUT_SIZE, HIDDEN_SIZE, NUM_LAYERS, OUTPUT_SIZE)

    out = jax.block_until_ready(lstm_module_forward(x, params))
    ref = jax.block_until_ready(lstm_module_reference(x, params))

    assert out.shape == (B, T, OUTPUT_SIZE), out.shape
    max_err = float(jnp.max(jnp.abs(out - ref)))
    assert jnp.allclose(out, ref, atol=1e-2, rtol=1e-2), max_err

    print("KERNEL_OK")
</pallas_src>

<mosaic_0001>
module attributes {stable_mosaic.version = 11 : i64} {
  func.func @_fused_lstm_fc_kernel(%arg0: i32, %arg1: memref<8x8x16xbf16, #tpu.memory_space<vmem>>, %arg2: memref<16x64xbf16, #tpu.memory_space<vmem>>, %arg3: memref<16x64xbf16, #tpu.memory_space<vmem>>, %arg4: memref<1x64xf32, #tpu.memory_space<vmem>>, %arg5: memref<16x64xbf16, #tpu.memory_space<vmem>>, %arg6: memref<16x64xbf16, #tpu.memory_space<vmem>>, %arg7: memref<1x64xf32, #tpu.memory_space<vmem>>, %arg8: memref<16x4xbf16, #tpu.memory_space<vmem>>, %arg9: memref<1x4xf32, #tpu.memory_space<vmem>>, %arg10: memref<8x8x4xf32, #tpu.memory_space<vmem>>, %arg11: memref<8x8x64xf32, #tpu.memory_space<vmem>>, %arg12: memref<8x8x16xf32, #tpu.memory_space<vmem>>) attributes {dimension_semantics = [#tpu.dimension_semantics<parallel>], iteration_bounds = array<i64: 1>, scalar_prefetch = 0 : i64, scratch_operands = 2 : i64, tpu.core_type = #tpu.core_type<tc>, window_params = [{transform_indices = @transform_0, window_bounds = array<i64: 8, 8, 16>}, {pipeline_mode = #tpu.pipeline_mode<synchronous>, transform_indices = @transform_1, window_bounds = array<i64: 16, 64>}, {pipeline_mode = #tpu.pipeline_mode<synchronous>, transform_indices = @transform_2, window_bounds = array<i64: 16, 64>}, {pipeline_mode = #tpu.pipeline_mode<synchronous>, transform_indices = @transform_3, window_bounds = array<i64: 1, 64>}, {pipeline_mode = #tpu.pipeline_mode<synchronous>, transform_indices = @transform_4, window_bounds = array<i64: 16, 64>}, {pipeline_mode = #tpu.pipeline_mode<synchronous>, transform_indices = @transform_5, window_bounds = array<i64: 16, 64>}, {pipeline_mode = #tpu.pipeline_mode<synchronous>, transform_indices = @transform_6, window_bounds = array<i64: 1, 64>}, {pipeline_mode = #tpu.pipeline_mode<synchronous>, transform_indices = @transform_7, window_bounds = array<i64: 16, 4>}, {pipeline_mode = #tpu.pipeline_mode<synchronous>, transform_indices = @transform_8, window_bounds = array<i64: 1, 4>}, {transform_indices = @transform_9, window_bounds = array<i64: 8, 8, 4>}]} {
    %c0 = arith.constant 0 : index
    %c0_0 = arith.constant 0 : index
    %c0_1 = arith.constant 0 : index
    %0 = vector.load %arg1[%c0, %c0_0, %c0_1] : memref<8x8x16xbf16, #tpu.memory_space<vmem>>, vector<8x8x16xbf16>
    %1 = vector.shape_cast %0 : vector<8x8x16xbf16> to vector<64x16xbf16>
    %c0_2 = arith.constant 0 : index
    %c0_3 = arith.constant 0 : index
    %2 = vector.load %arg2[%c0_2, %c0_3] : memref<16x64xbf16, #tpu.memory_space<vmem>>, vector<16x64xbf16>
    %cst = arith.constant dense<0.000000e+00> : vector<64x64xf32>
    %3 = tpu.matmul %1, %2, %cst {dimension_numbers = #tpu.dot_dimension_numbers<[1], [0], [0], [1], [0, 0, 1, 1], [], []>} : vector<64x16xbf16>, vector<16x64xbf16>, vector<64x64xf32> -> vector<64x64xf32>
    %c0_4 = arith.constant 0 : index
    %c0_5 = arith.constant 0 : index
    %4 = vector.load %arg4[%c0_4, %c0_5] : memref<1x64xf32, #tpu.memory_space<vmem>>, vector<1x64xf32>
    %5 = vector.broadcast %4 : vector<1x64xf32> to vector<64x64xf32>
    %6 = arith.addf %3, %5 : vector<64x64xf32>
    %7 = vector.shape_cast %6 : vector<64x64xf32> to vector<8x8x64xf32>
    %c0_6 = arith.constant 0 : index
    %c0_7 = arith.constant 0 : index
    %c0_8 = arith.constant 0 : index
    %8 = vector.load %arg11[%c0_6, %c0_7, %c0_8] : memref<8x8x64xf32, #tpu.memory_space<vmem>>, vector<8x8x64xf32>
    tpu.vector_store %arg11[%c0_6, %c0_7, %c0_8], %7 {strides = array<i32>} : memref<8x8x64xf32, #tpu.memory_space<vmem>>, vector<8x8x64xf32>,
    %cst_9 = arith.constant 0.000000e+00 : f32
    %9 = vector.broadcast %cst_9 : f32 to vector<8x16xf32>
    %cst_10 = arith.constant 0.000000e+00 : f32
    %10 = vector.broadcast %cst_10 : f32 to vector<8x16xf32>
    %c0_i32 = arith.constant 0 : i32
    %11 = arith.index_cast %c0_i32 : i32 to index
    %c0_11 = arith.constant 0 : index
    %c0_12 = arith.constant 0 : index
    %12 = vector.load %arg11[%11, %c0_11, %c0_12] : memref<8x8x64xf32, #tpu.memory_space<vmem>>, vector<1x8x64xf32>
    %13 = vector.shape_cast %12 : vector<1x8x64xf32> to vector<8x64xf32>
    %14 = arith.truncf %9 : vector<8x16xf32> to vector<8x16xbf16>
    %c0_13 = arith.constant 0 : index
    %c0_14 = arith.constant 0 : index
    %15 = vector.load %arg3[%c0_13, %c0_14] : memref<16x64xbf16, #tpu.memory_space<vmem>>, vector<16x64xbf16>
    %cst_15 = arith.constant dense<0.000000e+00> : vector<8x64xf32>
    %16 = tpu.matmul %14, %15, %cst_15 {dimension_numbers = #tpu.dot_dimension_numbers<[1], [0], [0], [1], [0, 0, 1, 1], [], []>} : vector<8x16xbf16>, vector<16x64xbf16>, vector<8x64xf32> -> vector<8x64xf32>
    %17 = arith.addf %13, %16 : vector<8x64xf32>
    %18 = vector.extract_strided_slice %17 {offsets = [0, 0], sizes = [8, 16], strides = [1, 1]} : vector<8x64xf32> to vector<8x16xf32>
    %19 = arith.negf %18 : vector<8x16xf32>
    %20 = math.exp %19 : vector<8x16xf32>
    %cst_16 = arith.constant 1.000000e+00 : f32
    %21 = vector.broadcast %cst_16 : f32 to vector<8x16xf32>
    %22 = arith.addf %21, %20 : vector<8x16xf32>
    %23 = arith.divf %21, %22 : vector<8x16xf32>
    %24 = vector.extract_strided_slice %17 {offsets = [0, 16], sizes = [8, 16], strides = [1, 1]} : vector<8x64xf32> to vector<8x16xf32>
    %25 = arith.negf %24 : vector<8x16xf32>
    %26 = math.exp %25 : vector<8x16xf32>
    %cst_17 = arith.constant 1.000000e+00 : f32
    %27 = vector.broadcast %cst_17 : f32 to vector<8x16xf32>
    %28 = arith.addf %27, %26 : vector<8x16xf32>
    %29 = arith.divf %27, %28 : vector<8x16xf32>
    %30 = vector.extract_strided_slice %17 {offsets = [0, 32], sizes = [8, 16], strides = [1, 1]} : vector<8x64xf32> to vector<8x16xf32>
    %31 = math.tanh %30 : vector<8x16xf32>
    %32 = vector.extract_strided_slice %17 {offsets = [0, 48], sizes = [8, 16], strides = [1, 1]} : vector<8x64xf32> to vector<8x16xf32>
    %33 = arith.negf %32 : vector<8x16xf32>
    %34 = math.exp %33 : vector<8x16xf32>
    %cst_18 = arith.constant 1.000000e+00 : f32
    %35 = vector.broadcast %cst_18 : f32 to vector<8x16xf32>
    %36 = arith.addf %35, %34 : vector<8x16xf32>
    %37 = arith.divf %35, %36 : vector<8x16xf32>
    %38 = arith.mulf %29, %10 : vector<8x16xf32>
    %39 = arith.mulf %23, %31 : vector<8x16xf32>
    %40 = arith.addf %38, %39 : vector<8x16xf32>
    %41 = math.tanh %40 : vector<8x16xf32>
    %42 = arith.mulf %37, %41 : vector<8x16xf32>
    %43 = arith.index_cast %c0_i32 : i32 to index
    %c0_19 = arith.constant 0 : index
    %c0_20 = arith.constant 0 : index
    %44 = vector.load %arg12[%43, %c0_19, %c0_20] : memref<8x8x16xf32, #tpu.memory_space<vmem>>, vector<1x8x16xf32>
    %45 = vector.shape_cast %44 : vector<1x8x16xf32> to vector<8x16xf32>
    %46 = vector.shape_cast %42 : vector<8x16xf32> to vector<1x8x16xf32>
    tpu.vector_store %arg12[%43, %c0_19, %c0_20], %46 {strides = array<i32>} : memref<8x8x16xf32, #tpu.memory_space<vmem>>, vector<1x8x16xf32>,
    %c1_i32 = arith.constant 1 : i32
    %47 = arith.index_cast %c1_i32 : i32 to index
    %c0_21 = arith.constant 0 : index
    %c0_22 = arith.constant 0 : index
    %48 = vector.load %arg11[%47, %c0_21, %c0_22] : memref<8x8x64xf32, #tpu.memory_space<vmem>>, vector<1x8x64xf32>
    %49 = vector.shape_cast %48 : vector<1x8x64xf32> to vector<8x64xf32>
    %50 = arith.truncf %42 : vector<8x16xf32> to vector<8x16xbf16>
    %c0_23 = arith.constant 0 : index
    %c0_24 = arith.constant 0 : index
    %51 = vector.load %arg3[%c0_23, %c0_24] : memref<16x64xbf16, #tpu.memory_space<vmem>>, vector<16x64xbf16>
    %cst_25 = arith.constant dense<0.000000e+00> : vector<8x64xf32>
    %52 = tpu.matmul %50, %51, %cst_25 {dimension_numbers = #tpu.dot_dimension_numbers<[1], [0], [0], [1], [0, 0, 1, 1], [], []>} : vector<8x16xbf16>, vector<16x64xbf16>, vector<8x64xf32> -> vector<8x64xf32>
    %53 = arith.addf %49, %52 : vector<8x64xf32>
    %54 = vector.extract_strided_slice %53 {offsets = [0, 0], sizes = [8, 16], strides = [1, 1]} : vector<8x64xf32> to vector<8x16xf32>
    %55 = arith.negf %54 : vector<8x16xf32>
    %56 = math.exp %55 : vector<8x16xf32>
    %cst_26 = arith.constant 1.000000e+00 : f32
    %57 = vector.broadcast %cst_26 : f32 to vector<8x16xf32>
    %58 = arith.addf %57, %56 : vector<8x16xf32>
    %59 = arith.divf %57, %58 : vector<8x16xf32>
    %60 = vector.extract_strided_slice %53 {offsets = [0, 16], sizes = [8, 16], strides = [1, 1]} : vector<8x64xf32> to vector<8x16xf32>
    %61 = arith.negf %60 : vector<8x16xf32>
    %62 = math.exp %61 : vector<8x16xf32>
    %cst_27 = arith.constant 1.000000e+00 : f32
    %63 = vector.broadcast %cst_27 : f32 to vector<8x16xf32>
    %64 = arith.addf %63, %62 : vector<8x16xf32>
    %65 = arith.divf %63, %64 : vector<8x16xf32>
    %66 = vector.extract_strided_slice %53 {offsets = [0, 32], sizes = [8, 16], strides = [1, 1]} : vector<8x64xf32> to vector<8x16xf32>
    %67 = math.tanh %66 : vector<8x16xf32>
    %68 = vector.extract_strided_slice %53 {offsets = [0, 48], sizes = [8, 16], strides = [1, 1]} : vector<8x64xf32> to vector<8x16xf32>
    %69 = arith.negf %68 : vector<8x16xf32>
    %70 = math.exp %69 : vector<8x16xf32>
    %cst_28 = arith.constant 1.000000e+00 : f32
    %71 = vector.broadcast %cst_28 : f32 to vector<8x16xf32>
    %72 = arith.addf %71, %70 : vector<8x16xf32>
    %73 = arith.divf %71, %72 : vector<8x16xf32>
    %74 = arith.mulf %65, %40 : vector<8x16xf32>
    %75 = arith.mulf %59, %67 : vector<8x16xf32>
    %76 = arith.addf %74, %75 : vector<8x16xf32>
    %77 = math.tanh %76 : vector<8x16xf32>
    %78 = arith.mulf %73, %77 : vector<8x16xf32>
    %79 = arith.index_cast %c1_i32 : i32 to index
    %c0_29 = arith.constant 0 : index
    %c0_30 = arith.constant 0 : index
    %80 = vector.load %arg12[%79, %c0_29, %c0_30] : memref<8x8x16xf32, #tpu.memory_space<vmem>>, vector<1x8x16xf32>
    %81 = vector.shape_cast %80 : vector<1x8x16xf32> to vector<8x16xf32>
    %82 = vector.shape_cast %78 : vector<8x16xf32> to vector<1x8x16xf32>
    tpu.vector_store %arg12[%79, %c0_29, %c0_30], %82 {strides = array<i32>} : memref<8x8x16xf32, #tpu.memory_space<vmem>>, vector<1x8x16xf32>,
    %c2_i32 = arith.constant 2 : i32
    %83 = arith.index_cast %c2_i32 : i32 to index
    %c0_31 = arith.constant 0 : index
    %c0_32 = arith.constant 0 : index
    %84 = vector.load %arg11[%83, %c0_31, %c0_32] : memref<8x8x64xf32, #tpu.memory_space<vmem>>, vector<1x8x64xf32>
    %85 = vector.shape_cast %84 : vector<1x8x64xf32> to vector<8x64xf32>
    %86 = arith.truncf %78 : vector<8x16xf32> to vector<8x16xbf16>
    %c0_33 = arith.constant 0 : index
    %c0_34 = arith.constant 0 : index
    %87 = vector.load %arg3[%c0_33, %c0_34] : memref<16x64xbf16, #tpu.memory_space<vmem>>, vector<16x64xbf16>
    %cst_35 = arith.constant dense<0.000000e+00> : vector<8x64xf32>
    %88 = tpu.matmul %86, %87, %cst_35 {dimension_numbers = #tpu.dot_dimension_numbers<[1], [0], [0], [1], [0, 0, 1, 1], [], []>} : vector<8x16xbf16>, vector<16x64xbf16>, vector<8x64xf32> -> vector<8x64xf32>
    %89 = arith.addf %85, %88 : vector<8x64xf32>
    %90 = vector.extract_strided_slice %89 {offsets = [0, 0], sizes = [8, 16], strides = [1, 1]} : vector<8x64xf32> to vector<8x16xf32>
    %91 = arith.negf %90 : vector<8x16xf32>
    %92 = math.exp %91 : vector<8x16xf32>
    %cst_36 = arith.constant 1.000000e+00 : f32
    %93 = vector.broadcast %cst_36 : f32 to vector<8x16xf32>
    %94 = arith.addf %93, %92 : vector<8x16xf32>
    %95 = arith.divf %93, %94 : vector<8x16xf32>
    %96 = vector.extract_strided_slice %89 {offsets = [0, 16], sizes = [8, 16], strides = [1, 1]} : vector<8x64xf32> to vector<8x16xf32>
    %97 = arith.negf %96 : vector<8x16xf32>
    %98 = math.exp %97 : vector<8x16xf32>
    %cst_37 = arith.constant 1.000000e+00 : f32
    %99 = vector.broadcast %cst_37 : f32 to vector<8x16xf32>
    %100 = arith.addf %99, %98 : vector<8x16xf32>
    %101 = arith.divf %99, %100 : vector<8x16xf32>
    %102 = vector.extract_strided_slice %89 {offsets = [0, 32], sizes = [8, 16], strides = [1, 1]} : vector<8x64xf32> to vector<8x16xf32>
    %103 = math.tanh %102 : vector<8x16xf32>
    %104 = vector.extract_strided_slice %89 {offsets = [0, 48], sizes = [8, 16], strides = [1, 1]} : vector<8x64xf32> to vector<8x16xf32>
    %105 = arith.negf %104 : vector<8x16xf32>
    %106 = math.exp %105 : vector<8x16xf32>
    %cst_38 = arith.constant 1.000000e+00 : f32
    %107 = vector.broadcast %cst_38 : f32 to vector<8x16xf32>
    %108 = arith.addf %107, %106 : vector<8x16xf32>
    %109 = arith.divf %107, %108 : vector<8x16xf32>
    %110 = arith.mulf %101, %76 : vector<8x16xf32>
    %111 = arith.mulf %95, %103 : vector<8x16xf32>
    %112 = arith.addf %110, %111 : vector<8x16xf32>
    %113 = math.tanh %112 : vector<8x16xf32>
    %114 = arith.mulf %109, %113 : vector<8x16xf32>
    %115 = arith.index_cast %c2_i32 : i32 to index
    %c0_39 = arith.constant 0 : index
    %c0_40 = arith.constant 0 : index
    %116 = vector.load %arg12[%115, %c0_39, %c0_40] : memref<8x8x16xf32, #tpu.memory_space<vmem>>, vector<1x8x16xf32>
    %117 = vector.shape_cast %116 : vector<1x8x16xf32> to vector<8x16xf32>
    %118 = vector.shape_cast %114 : vector<8x16xf32> to vector<1x8x16xf32>
    tpu.vector_store %arg12[%115, %c0_39, %c0_40], %118 {strides = array<i32>} : memref<8x8x16xf32, #tpu.memory_space<vmem>>, vector<1x8x16xf32>,
    %c3_i32 = arith.constant 3 : i32
    %119 = arith.index_cast %c3_i32 : i32 to index
    %c0_41 = arith.constant 0 : index
    %c0_42 = arith.constant 0 : index
    %120 = vector.load %arg11[%119, %c0_41, %c0_42] : memref<8x8x64xf32, #tpu.memory_space<vmem>>, vector<1x8x64xf32>
    %121 = vector.shape_cast %120 : vector<1x8x64xf32> to vector<8x64xf32>
    %122 = arith.truncf %114 : vector<8x16xf32> to vector<8x16xbf16>
    %c0_43 = arith.constant 0 : index
    %c0_44 = arith.constant 0 : index
    %123 = vector.load %arg3[%c0_43, %c0_44] : memref<16x64xbf16, #tpu.memory_space<vmem>>, vector<16x64xbf16>
    %cst_45 = arith.constant dense<0.000000e+00> : vector<8x64xf32>
    %124 = tpu.matmul %122, %123, %cst_45 {dimension_numbers = #tpu.dot_dimension_numbers<[1], [0], [0], [1], [0, 0, 1, 1], [], []>} : vector<8x16xbf16>, vector<16x64xbf16>, vector<8x64xf32> -> vector<8x64xf32>
    %125 = arith.addf %121, %124 : vector<8x64xf32>
    %126 = vector.extract_strided_slice %125 {offsets = [0, 0], sizes = [8, 16], strides = [1, 1]} : vector<8x64xf32> to vector<8x16xf32>
    %127 = arith.negf %126 : vector<8x16xf32>
    %128 = math.exp %127 : vector<8x16xf32>
    %cst_46 = arith.constant 1.000000e+00 : f32
    %129 = vector.broadcast %cst_46 : f32 to vector<8x16xf32>
    %130 = arith.addf %129, %128 : vector<8x16xf32>
    %131 = arith.divf %129, %130 : vector<8x16xf32>
    %132 = vector.extract_strided_slice %125 {offsets = [0, 16], sizes = [8, 16], strides = [1, 1]} : vector<8x64xf32> to vector<8x16xf32>
    %133 = arith.negf %132 : vector<8x16xf32>
    %134 = math.exp %133 : vector<8x16xf32>
    %cst_47 = arith.constant 1.000000e+00 : f32
    %135 = vector.broadcast %cst_47 : f32 to vector<8x16xf32>
    %136 = arith.addf %135, %134 : vector<8x16xf32>
    %137 = arith.divf %135, %136 : vector<8x16xf32>
    %138 = vector.extract_strided_slice %125 {offsets = [0, 32], sizes = [8, 16], strides = [1, 1]} : vector<8x64xf32> to vector<8x16xf32>
    %139 = math.tanh %138 : vector<8x16xf32>
    %140 = vector.extract_strided_slice %125 {offsets = [0, 48], sizes = [8, 16], strides = [1, 1]} : vector<8x64xf32> to vector<8x16xf32>
    %141 = arith.negf %140 : vector<8x16xf32>
    %142 = math.exp %141 : vector<8x16xf32>
    %cst_48 = arith.constant 1.000000e+00 : f32
    %143 = vector.broadcast %cst_48 : f32 to vector<8x16xf32>
    %144 = arith.addf %143, %142 : vector<8x16xf32>
    %145 = arith.divf %143, %144 : vector<8x16xf32>
    %146 = arith.mulf %137, %112 : vector<8x16xf32>
    %147 = arith.mulf %131, %139 : vector<8x16xf32>
    %148 = arith.addf %146, %147 : vector<8x16xf32>
    %149 = math.tanh %148 : vector<8x16xf32>
    %150 = arith.mulf %145, %149 : vector<8x16xf32>
    %151 = arith.index_cast %c3_i32 : i32 to index
    %c0_49 = arith.constant 0 : index
    %c0_50 = arith.constant 0 : index
    %152 = vector.load %arg12[%151, %c0_49, %c0_50] : memref<8x8x16xf32, #tpu.memory_space<vmem>>, vector<1x8x16xf32>
    %153 = vector.shape_cast %152 : vector<1x8x16xf32> to vector<8x16xf32>
    %154 = vector.shape_cast %150 : vector<8x16xf32> to vector<1x8x16xf32>
    tpu.vector_store %arg12[%151, %c0_49, %c0_50], %154 {strides = array<i32>} : memref<8x8x16xf32, #tpu.memory_space<vmem>>, vector<1x8x16xf32>,
    %c4_i32 = arith.constant 4 : i32
    %155 = arith.index_cast %c4_i32 : i32 to index
    %c0_51 = arith.constant 0 : index
    %c0_52 = arith.constant 0 : index
    %156 = vector.load %arg11[%155, %c0_51, %c0_52] : memref<8x8x64xf32, #tpu.memory_space<vmem>>, vector<1x8x64xf32>
    %157 = vector.shape_cast %156 : vector<1x8x64xf32> to vector<8x64xf32>
    %158 = arith.truncf %150 : vector<8x16xf32> to vector<8x16xbf16>
    %c0_53 = arith.constant 0 : index
    %c0_54 = arith.constant 0 : index
    %159 = vector.load %arg3[%c0_53, %c0_54] : memref<16x64xbf16, #tpu.memory_space<vmem>>, vector<16x64xbf16>
    %cst_55 = arith.constant dense<0.000000e+00> : vector<8x64xf32>
    %160 = tpu.matmul %158, %159, %cst_55 {dimension_numbers = #tpu.dot_dimension_numbers<[1], [0], [0], [1], [0, 0, 1, 1], [], []>} : vector<8x16xbf16>, vector<16x64xbf16>, vector<8x64xf32> -> vector<8x64xf32>
    %161 = arith.addf %157, %160 : vector<8x64xf32>
    %162 = vector.extract_strided_slice %161 {offsets = [0, 0], sizes = [8, 16], strides = [1, 1]} : vector<8x64xf32> to vector<8x16xf32>
    %163 = arith.negf %162 : vector<8x16xf32>
    %164 = math.exp %163 : vector<8x16xf32>
    %cst_56 = arith.constant 1.000000e+00 : f32
    %165 = vector.broadcast %cst_56 : f32 to vector<8x16xf32>
    %166 = arith.addf %165, %164 : vector<8x16xf32>
    %167 = arith.divf %165, %166 : vector<8x16xf32>
    %168 = vector.extract_strided_slice %161 {offsets = [0, 16], sizes = [8, 16], strides = [1, 1]} : vector<8x64xf32> to vector<8x16xf32>
    %169 = arith.negf %168 : vector<8x16xf32>
    %170 = math.exp %169 : vector<8x16xf32>
    %cst_57 = arith.constant 1.000000e+00 : f32
    %171 = vector.broadcast %cst_57 : f32 to vector<8x16xf32>
    %172 = arith.addf %171, %170 : vector<8x16xf32>
    %173 = arith.divf %171, %172 : vector<8x16xf32>
    %174 = vector.extract_strided_slice %161 {offsets = [0, 32], sizes = [8, 16], strides = [1, 1]} : vector<8x64xf32> to vector<8x16xf32>
    %175 = math.tanh %174 : vector<8x16xf32>
    %176 = vector.extract_strided_slice %161 {offsets = [0, 48], sizes = [8, 16], strides = [1, 1]} : vector<8x64xf32> to vector<8x16xf32>
    %177 = arith.negf %176 : vector<8x16xf32>
    %178 = math.exp %177 : vector<8x16xf32>
    %cst_58 = arith.constant 1.000000e+00 : f32
    %179 = vector.broadcast %cst_58 : f32 to vector<8x16xf32>
    %180 = arith.addf %179, %178 : vector<8x16xf32>
    %181 = arith.divf %179, %180 : vector<8x16xf32>
    %182 = arith.mulf %173, %148 : vector<8x16xf32>
    %183 = arith.mulf %167, %175 : vector<8x16xf32>
    %184 = arith.addf %182, %183 : vector<8x16xf32>
    %185 = math.tanh %184 : vector<8x16xf32>
    %186 = arith.mulf %181, %185 : vector<8x16xf32>
    %187 = arith.index_cast %c4_i32 : i32 to index
    %c0_59 = arith.constant 0 : index
    %c0_60 = arith.constant 0 : index
    %188 = vector.load %arg12[%187, %c0_59, %c0_60] : memref<8x8x16xf32, #tpu.memory_space<vmem>>, vector<1x8x16xf32>
    %189 = vector.shape_cast %188 : vector<1x8x16xf32> to vector<8x16xf32>
    %190 = vector.shape_cast %186 : vector<8x16xf32> to vector<1x8x16xf32>
    tpu.vector_store %arg12[%187, %c0_59, %c0_60], %190 {strides = array<i32>} : memref<8x8x16xf32, #tpu.memory_space<vmem>>, vector<1x8x16xf32>,
    %c5_i32 = arith.constant 5 : i32
    %191 = arith.index_cast %c5_i32 : i32 to index
    %c0_61 = arith.constant 0 : index
    %c0_62 = arith.constant 0 : index
    %192 = vector.load %arg11[%191, %c0_61, %c0_62] : memref<8x8x64xf32, #tpu.memory_space<vmem>>, vector<1x8x64xf32>
    %193 = vector.shape_cast %192 : vector<1x8x64xf32> to vector<8x64xf32>
    %194 = arith.truncf %186 : vector<8x16xf32> to vector<8x16xbf16>
    %c0_63 = arith.constant 0 : index
    %c0_64 = arith.constant 0 : index
    %195 = vector.load %arg3[%c0_63, %c0_64] : memref<16x64xbf16, #tpu.memory_space<vmem>>, vector<16x64xbf16>
    %cst_65 = arith.constant dense<0.000000e+00> : vector<8x64xf32>
    %196 = tpu.matmul %194, %195, %cst_65 {dimension_numbers = #tpu.dot_dimension_numbers<[1], [0], [0], [1], [0, 0, 1, 1], [], []>} : vector<8x16xbf16>, vector<16x64xbf16>, vector<8x64xf32> -> vector<8x64xf32>
    %197 = arith.addf %193, %196 : vector<8x64xf32>
    %198 = vector.extract_strided_slice %197 {offsets = [0, 0], sizes = [8, 16], strides = [1, 1]} : vector<8x64xf32> to vector<8x16xf32>
    %199 = arith.negf %198 : vector<8x16xf32>
    %200 = math.exp %199 : vector<8x16xf32>
    %cst_66 = arith.constant 1.000000e+00 : f32
    %201 = vector.broadcast %cst_66 : f32 to vector<8x16xf32>
    %202 = arith.addf %201, %200 : vector<8x16xf32>
    %203 = arith.divf %201, %202 : vector<8x16xf32>
    %204 = vector.extract_strided_slice %197 {offsets = [0, 16], sizes = [8, 16], strides = [1, 1]} : vector<8x64xf32> to vector<8x16xf32>
    %205 = arith.negf %204 : vector<8x16xf32>
    %206 = math.exp %205 : vector<8x16xf32>
    %cst_67 = arith.constant 1.000000e+00 : f32
    %207 = vector.broadcast %cst_67 : f32 to vector<8x16xf32>
    %208 = arith.addf %207, %206 : vector<8x16xf32>
    %209 = arith.divf %207, %208 : vector<8x16xf32>
    %210 = vector.extract_strided_slice %197 {offsets = [0, 32], sizes = [8, 16], strides = [1, 1]} : vector<8x64xf32> to vector<8x16xf32>
    %211 = math.tanh %210 : vector<8x16xf32>
    %212 = vector.extract_strided_slice %197 {offsets = [0, 48], sizes = [8, 16], strides = [1, 1]} : vector<8x64xf32> to vector<8x16xf32>
    %213 = arith.negf %212 : vector<8x16xf32>
    %214 = math.exp %213 : vector<8x16xf32>
    %cst_68 = arith.constant 1.000000e+00 : f32
    %215 = vector.broadcast %cst_68 : f32 to vector<8x16xf32>
    %216 = arith.addf %215, %214 : vector<8x16xf32>
    %217 = arith.divf %215, %216 : vector<8x16xf32>
    %218 = arith.mulf %209, %184 : vector<8x16xf32>
    %219 = arith.mulf %203, %211 : vector<8x16xf32>
    %220 = arith.addf %218, %219 : vector<8x16xf32>
    %221 = math.tanh %220 : vector<8x16xf32>
    %222 = arith.mulf %217, %221 : vector<8x16xf32>
    %223 = arith.index_cast %c5_i32 : i32 to index
    %c0_69 = arith.constant 0 : index
    %c0_70 = arith.constant 0 : index
    %224 = vector.load %arg12[%223, %c0_69, %c0_70] : memref<8x8x16xf32, #tpu.memory_space<vmem>>, vector<1x8x16xf32>
    %225 = vector.shape_cast %224 : vector<1x8x16xf32> to vector<8x16xf32>
    %226 = vector.shape_cast %222 : vector<8x16xf32> to vector<1x8x16xf32>
    tpu.vector_store %arg12[%223, %c0_69, %c0_70], %226 {strides = array<i32>} : memref<8x8x16xf32, #tpu.memory_space<vmem>>, vector<1x8x16xf32>,
    %c6_i32 = arith.constant 6 : i32
    %227 = arith.index_cast %c6_i32 : i32 to index
    %c0_71 = arith.constant 0 : index
    %c0_72 = arith.constant 0 : index
    %228 = vector.load %arg11[%227, %c0_71, %c0_72] : memref<8x8x64xf32, #tpu.memory_space<vmem>>, vector<1x8x64xf32>
    %229 = vector.shape_cast %228 : vector<1x8x64xf32> to vector<8x64xf32>
    %230 = arith.truncf %222 : vector<8x16xf32> to vector<8x16xbf16>
    %c0_73 = arith.constant 0 : index
    %c0_74 = arith.constant 0 : index
    %231 = vector.load %arg3[%c0_73, %c0_74] : memref<16x64xbf16, #tpu.memory_space<vmem>>, vector<16x64xbf16>
    %cst_75 = arith.constant dense<0.000000e+00> : vector<8x64xf32>
    %232 = tpu.matmul %230, %231, %cst_75 {dimension_numbers = #tpu.dot_dimension_numbers<[1], [0], [0], [1], [0, 0, 1, 1], [], []>} : vector<8x16xbf16>, vector<16x64xbf16>, vector<8x64xf32> -> vector<8x64xf32>
    %233 = arith.addf %229, %232 : vector<8x64xf32>
    %234 = vector.extract_strided_slice %233 {offsets = [0, 0], sizes = [8, 16], strides = [1, 1]} : vector<8x64xf32> to vector<8x16xf32>
    %235 = arith.negf %234 : vector<8x16xf32>
    %236 = math.exp %235 : vector<8x16xf32>
    %cst_76 = arith.constant 1.000000e+00 : f32
    %237 = vector.broadcast %cst_76 : f32 to vector<8x16xf32>
    %238 = arith.addf %237, %236 : vector<8x16xf32>
    %239 = arith.divf %237, %238 : vector<8x16xf32>
    %240 = vector.extract_strided_slice %233 {offsets = [0, 16], sizes = [8, 16], strides = [1, 1]} : vector<8x64xf32> to vector<8x16xf32>
    %241 = arith.negf %240 : vector<8x16xf32>
    %242 = math.exp %241 : vector<8x16xf32>
    %cst_77 = arith.constant 1.000000e+00 : f32
    %243 = vector.broadcast %cst_77 : f32 to vector<8x16xf32>
    %244 = arith.addf %243, %242 : vector<8x16xf32>
    %245 = arith.divf %243, %244 : vector<8x16xf32>
    %246 = vector.extract_strided_slice %233 {offsets = [0, 32], sizes = [8, 16], strides = [1, 1]} : vector<8x64xf32> to vector<8x16xf32>
    %247 = math.tanh %246 : vector<8x16xf32>
    %248 = vector.extract_strided_slice %233 {offsets = [0, 48], sizes = [8, 16], strides = [1, 1]} : vector<8x64xf32> to vector<8x16xf32>
    %249 = arith.negf %248 : vector<8x16xf32>
    %250 = math.exp %249 : vector<8x16xf32>
    %cst_78 = arith.constant 1.000000e+00 : f32
    %251 = vector.broadcast %cst_78 : f32 to vector<8x16xf32>
    %252 = arith.addf %251, %250 : vector<8x16xf32>
    %253 = arith.divf %251, %252 : vector<8x16xf32>
    %254 = arith.mulf %245, %220 : vector<8x16xf32>
    %255 = arith.mulf %239, %247 : vector<8x16xf32>
    %256 = arith.addf %254, %255 : vector<8x16xf32>
    %257 = math.tanh %256 : vector<8x16xf32>
    %258 = arith.mulf %253, %257 : vector<8x16xf32>
    %259 = arith.index_cast %c6_i32 : i32 to index
    %c0_79 = arith.constant 0 : index
    %c0_80 = arith.constant 0 : index
    %260 = vector.load %arg12[%259, %c0_79, %c0_80] : memref<8x8x16xf32, #tpu.memory_space<vmem>>, vector<1x8x16xf32>
    %261 = vector.shape_cast %260 : vector<1x8x16xf32> to vector<8x16xf32>
    %262 = vector.shape_cast %258 : vector<8x16xf32> to vector<1x8x16xf32>
    tpu.vector_store %arg12[%259, %c0_79, %c0_80], %262 {strides = array<i32>} : memref<8x8x16xf32, #tpu.memory_space<vmem>>, vector<1x8x16xf32>,
    %c7_i32 = arith.constant 7 : i32
    %263 = arith.index_cast %c7_i32 : i32 to index
    %c0_81 = arith.constant 0 : index
    %c0_82 = arith.constant 0 : index
    %264 = vector.load %arg11[%263, %c0_81, %c0_82] : memref<8x8x64xf32, #tpu.memory_space<vmem>>, vector<1x8x64xf32>
    %265 = vector.shape_cast %264 : vector<1x8x64xf32> to vector<8x64xf32>
    %266 = arith.truncf %258 : vector<8x16xf32> to vector<8x16xbf16>
    %c0_83 = arith.constant 0 : index
    %c0_84 = arith.constant 0 : index
    %267 = vector.load %arg3[%c0_83, %c0_84] : memref<16x64xbf16, #tpu.memory_space<vmem>>, vector<16x64xbf16>
    %cst_85 = arith.constant dense<0.000000e+00> : vector<8x64xf32>
    %268 = tpu.matmul %266, %267, %cst_85 {dimension_numbers = #tpu.dot_dimension_numbers<[1], [0], [0], [1], [0, 0, 1, 1], [], []>} : vector<8x16xbf16>, vector<16x64xbf16>, vector<8x64xf32> -> vector<8x64xf32>
    %269 = arith.addf %265, %268 : vector<8x64xf32>
    %270 = vector.extract_strided_slice %269 {offsets = [0, 0], sizes = [8, 16], strides = [1, 1]} : vector<8x64xf32> to vector<8x16xf32>
    %271 = arith.negf %270 : vector<8x16xf32>
    %272 = math.exp %271 : vector<8x16xf32>
    %cst_86 = arith.constant 1.000000e+00 : f32
    %273 = vector.broadcast %cst_86 : f32 to vector<8x16xf32>
    %274 = arith.addf %273, %272 : vector<8x16xf32>
    %275 = arith.divf %273, %274 : vector<8x16xf32>
    %276 = vector.extract_strided_slice %269 {offsets = [0, 16], sizes = [8, 16], strides = [1, 1]} : vector<8x64xf32> to vector<8x16xf32>
    %277 = arith.negf %276 : vector<8x16xf32>
    %278 = math.exp %277 : vector<8x16xf32>
    %cst_87 = arith.constant 1.000000e+00 : f32
    %279 = vector.broadcast %cst_87 : f32 to vector<8x16xf32>
    %280 = arith.addf %279, %278 : vector<8x16xf32>
    %281 = arith.divf %279, %280 : vector<8x16xf32>
    %282 = vector.extract_strided_slice %269 {offsets = [0, 32], sizes = [8, 16], strides = [1, 1]} : vector<8x64xf32> to vector<8x16xf32>
    %283 = math.tanh %282 : vector<8x16xf32>
    %284 = vector.extract_strided_slice %269 {offsets = [0, 48], sizes = [8, 16], strides = [1, 1]} : vector<8x64xf32> to vector<8x16xf32>
    %285 = arith.negf %284 : vector<8x16xf32>
    %286 = math.exp %285 : vector<8x16xf32>
    %cst_88 = arith.constant 1.000000e+00 : f32
    %287 = vector.broadcast %cst_88 : f32 to vector<8x16xf32>
    %288 = arith.addf %287, %286 : vector<8x16xf32>
    %289 = arith.divf %287, %288 : vector<8x16xf32>
    %290 = arith.mulf %281, %256 : vector<8x16xf32>
    %291 = arith.mulf %275, %283 : vector<8x16xf32>
    %292 = arith.addf %290, %291 : vector<8x16xf32>
    %293 = math.tanh %292 : vector<8x16xf32>
    %294 = arith.mulf %289, %293 : vector<8x16xf32>
    %295 = arith.index_cast %c7_i32 : i32 to index
    %c0_89 = arith.constant 0 : index
    %c0_90 = arith.constant 0 : index
    %296 = vector.load %arg12[%295, %c0_89, %c0_90] : memref<8x8x16xf32, #tpu.memory_space<vmem>>, vector<1x8x16xf32>
    %297 = vector.shape_cast %296 : vector<1x8x16xf32> to vector<8x16xf32>
    %298 = vector.shape_cast %294 : vector<8x16xf32> to vector<1x8x16xf32>
    tpu.vector_store %arg12[%295, %c0_89, %c0_90], %298 {strides = array<i32>} : memref<8x8x16xf32, #tpu.memory_space<vmem>>, vector<1x8x16xf32>,
    %c8_i32 = arith.constant 8 : i32
    %c0_91 = arith.constant 0 : index
    %c0_92 = arith.constant 0 : index
    %c0_93 = arith.constant 0 : index
    %299 = vector.load %arg12[%c0_91, %c0_92, %c0_93] : memref<8x8x16xf32, #tpu.memory_space<vmem>>, vector<8x8x16xf32>
    %300 = vector.shape_cast %299 : vector<8x8x16xf32> to vector<64x16xf32>
    %301 = arith.truncf %300 : vector<64x16xf32> to vector<64x16xbf16>
    %c0_94 = arith.constant 0 : index
    %c0_95 = arith.constant 0 : index
    %302 = vector.load %arg5[%c0_94, %c0_95] : memref<16x64xbf16, #tpu.memory_space<vmem>>, vector<16x64xbf16>
    %cst_96 = arith.constant dense<0.000000e+00> : vector<64x64xf32>
    %303 = tpu.matmul %301, %302, %cst_96 {dimension_numbers = #tpu.dot_dimension_numbers<[1], [0], [0], [1], [0, 0, 1, 1], [], []>} : vector<64x16xbf16>, vector<16x64xbf16>, vector<64x64xf32> -> vector<64x64xf32>
    %c0_97 = arith.constant 0 : index
    %c0_98 = arith.constant 0 : index
    %304 = vector.load %arg7[%c0_97, %c0_98] : memref<1x64xf32, #tpu.memory_space<vmem>>, vector<1x64xf32>
    %305 = vector.broadcast %304 : vector<1x64xf32> to vector<64x64xf32>
    %306 = arith.addf %303, %305 : vector<64x64xf32>
    %307 = vector.shape_cast %306 : vector<64x64xf32> to vector<8x8x64xf32>
    %c0_99 = arith.constant 0 : index
    %c0_100 = arith.constant 0 : index
    %c0_101 = arith.constant 0 : index
    %308 = vector.load %arg11[%c0_99, %c0_100, %c0_101] : memref<8x8x64xf32, #tpu.memory_space<vmem>>, vector<8x8x64xf32>
    tpu.vector_store %arg11[%c0_99, %c0_100, %c0_101], %307 {strides = array<i32>} : memref<8x8x64xf32, #tpu.memory_space<vmem>>, vector<8x8x64xf32>,
    %c0_i32_102 = arith.constant 0 : i32
    %309 = arith.index_cast %c0_i32_102 : i32 to index
    %c0_103 = arith.constant 0 : index
    %c0_104 = arith.constant 0 : index
    %310 = vector.load %arg11[%309, %c0_103, %c0_104] : memref<8x8x64xf32, #tpu.memory_space<vmem>>, vector<1x8x64xf32>
    %311 = vector.shape_cast %310 : vector<1x8x64xf32> to vector<8x64xf32>
    %312 = arith.truncf %9 : vector<8x16xf32> to vector<8x16xbf16>
    %c0_105 = arith.constant 0 : index
    %c0_106 = arith.constant 0 : index
    %313 = vector.load %arg6[%c0_105, %c0_106] : memref<16x64xbf16, #tpu.memory_space<vmem>>, vector<16x64xbf16>
    %cst_107 = arith.constant dense<0.000000e+00> : vector<8x64xf32>
    %314 = tpu.matmul %312, %313, %cst_107 {dimension_numbers = #tpu.dot_dimension_numbers<[1], [0], [0], [1], [0, 0, 1, 1], [], []>} : vector<8x16xbf16>, vector<16x64xbf16>, vector<8x64xf32> -> vector<8x64xf32>
    %315 = arith.addf %311, %314 : vector<8x64xf32>
    %316 = vector.extract_strided_slice %315 {offsets = [0, 0], sizes = [8, 16], strides = [1, 1]} : vector<8x64xf32> to vector<8x16xf32>
    %317 = arith.negf %316 : vector<8x16xf32>
    %318 = math.exp %317 : vector<8x16xf32>
    %cst_108 = arith.constant 1.000000e+00 : f32
    %319 = vector.broadcast %cst_108 : f32 to vector<8x16xf32>
    %320 = arith.addf %319, %318 : vector<8x16xf32>
    %321 = arith.divf %319, %320 : vector<8x16xf32>
    %322 = vector.extract_strided_slice %315 {offsets = [0, 16], sizes = [8, 16], strides = [1, 1]} : vector<8x64xf32> to vector<8x16xf32>
    %323 = arith.negf %322 : vector<8x16xf32>
    %324 = math.exp %323 : vector<8x16xf32>
    %cst_109 = arith.constant 1.000000e+00 : f32
    %325 = vector.broadcast %cst_109 : f32 to vector<8x16xf32>
    %326 = arith.addf %325, %324 : vector<8x16xf32>
    %327 = arith.divf %325, %326 : vector<8x16xf32>
    %328 = vector.extract_strided_slice %315 {offsets = [0, 32], sizes = [8, 16], strides = [1, 1]} : vector<8x64xf32> to vector<8x16xf32>
    %329 = math.tanh %328 : vector<8x16xf32>
    %330 = vector.extract_strided_slice %315 {offsets = [0, 48], sizes = [8, 16], strides = [1, 1]} : vector<8x64xf32> to vector<8x16xf32>
    %331 = arith.negf %330 : vector<8x16xf32>
    %332 = math.exp %331 : vector<8x16xf32>
    %cst_110 = arith.constant 1.000000e+00 : f32
    %333 = vector.broadcast %cst_110 : f32 to vector<8x16xf32>
    %334 = arith.addf %333, %332 : vector<8x16xf32>
    %335 = arith.divf %333, %334 : vector<8x16xf32>
    %336 = arith.mulf %327, %10 : vector<8x16xf32>
    %337 = arith.mulf %321, %329 : vector<8x16xf32>
    %338 = arith.addf %336, %337 : vector<8x16xf32>
    %339 = math.tanh %338 : vector<8x16xf32>
    %340 = arith.mulf %335, %339 : vector<8x16xf32>
    %341 = arith.index_cast %c0_i32_102 : i32 to index
    %c0_111 = arith.constant 0 : index
    %c0_112 = arith.constant 0 : index
    %342 = vector.load %arg12[%341, %c0_111, %c0_112] : memref<8x8x16xf32, #tpu.memory_space<vmem>>, vector<1x8x16xf32>
    %343 = vector.shape_cast %342 : vector<1x8x16xf32> to vector<8x16xf32>
    %344 = vector.shape_cast %340 : vector<8x16xf32> to vector<1x8x16xf32>
    tpu.vector_store %arg12[%341, %c0_111, %c0_112], %344 {strides = array<i32>} : memref<8x8x16xf32, #tpu.memory_space<vmem>>, vector<1x8x16xf32>,
    %c1_i32_113 = arith.constant 1 : i32
    %345 = arith.index_cast %c1_i32_113 : i32 to index
    %c0_114 = arith.constant 0 : index
    %c0_115 = arith.constant 0 : index
    %346 = vector.load %arg11[%345, %c0_114, %c0_115] : memref<8x8x64xf32, #tpu.memory_space<vmem>>, vector<1x8x64xf32>
    %347 = vector.shape_cast %346 : vector<1x8x64xf32> to vector<8x64xf32>
    %348 = arith.truncf %340 : vector<8x16xf32> to vector<8x16xbf16>
    %c0_116 = arith.constant 0 : index
    %c0_117 = arith.constant 0 : index
    %349 = vector.load %arg6[%c0_116, %c0_117] : memref<16x64xbf16, #tpu.memory_space<vmem>>, vector<16x64xbf16>
    %cst_118 = arith.constant dense<0.000000e+00> : vector<8x64xf32>
    %350 = tpu.matmul %348, %349, %cst_118 {dimension_numbers = #tpu.dot_dimension_numbers<[1], [0], [0], [1], [0, 0, 1, 1], [], []>} : vector<8x16xbf16>, vector<16x64xbf16>, vector<8x64xf32> -> vector<8x64xf32>
    %351 = arith.addf %347, %350 : vector<8x64xf32>
    %352 = vector.extract_strided_slice %351 {offsets = [0, 0], sizes = [8, 16], strides = [1, 1]} : vector<8x64xf32> to vector<8x16xf32>
    %353 = arith.negf %352 : vector<8x16xf32>
    %354 = math.exp %353 : vector<8x16xf32>
    %cst_119 = arith.constant 1.000000e+00 : f32
    %355 = vector.broadcast %cst_119 : f32 to vector<8x16xf32>
    %356 = arith.addf %355, %354 : vector<8x16xf32>
    %357 = arith.divf %355, %356 : vector<8x16xf32>
    %358 = vector.extract_strided_slice %351 {offsets = [0, 16], sizes = [8, 16], strides = [1, 1]} : vector<8x64xf32> to vector<8x16xf32>
    %359 = arith.negf %358 : vector<8x16xf32>
    %360 = math.exp %359 : vector<8x16xf32>
    %cst_120 = arith.constant 1.000000e+00 : f32
    %361 = vector.broadcast %cst_120 : f32 to vector<8x16xf32>
    %362 = arith.addf %361, %360 : vector<8x16xf32>
    %363 = arith.divf %361, %362 : vector<8x16xf32>
    %364 = vector.extract_strided_slice %351 {offsets = [0, 32], sizes = [8, 16], strides = [1, 1]} : vector<8x64xf32> to vector<8x16xf32>
    %365 = math.tanh %364 : vector<8x16xf32>
    %366 = vector.extract_strided_slice %351 {offsets = [0, 48], sizes = [8, 16], strides = [1, 1]} : vector<8x64xf32> to vector<8x16xf32>
    %367 = arith.negf %366 : vector<8x16xf32>
    %368 = math.exp %367 : vector<8x16xf32>
    %cst_121 = arith.constant 1.000000e+00 : f32
    %369 = vector.broadcast %cst_121 : f32 to vector<8x16xf32>
    %370 = arith.addf %369, %368 : vector<8x16xf32>
    %371 = arith.divf %369, %370 : vector<8x16xf32>
    %372 = arith.mulf %363, %338 : vector<8x16xf32>
    %373 = arith.mulf %357, %365 : vector<8x16xf32>
    %374 = arith.addf %372, %373 : vector<8x16xf32>
    %375 = math.tanh %374 : vector<8x16xf32>
    %376 = arith.mulf %371, %375 : vector<8x16xf32>
    %377 = arith.index_cast %c1_i32_113 : i32 to index
    %c0_122 = arith.constant 0 : index
    %c0_123 = arith.constant 0 : index
    %378 = vector.load %arg12[%377, %c0_122, %c0_123] : memref<8x8x16xf32, #tpu.memory_space<vmem>>, vector<1x8x16xf32>
    %379 = vector.shape_cast %378 : vector<1x8x16xf32> to vector<8x16xf32>
    %380 = vector.shape_cast %376 : vector<8x16xf32> to vector<1x8x16xf32>
    tpu.vector_store %arg12[%377, %c0_122, %c0_123], %380 {strides = array<i32>} : memref<8x8x16xf32, #tpu.memory_space<vmem>>, vector<1x8x16xf32>,
    %c2_i32_124 = arith.constant 2 : i32
    %381 = arith.index_cast %c2_i32_124 : i32 to index
    %c0_125 = arith.constant 0 : index
    %c0_126 = arith.constant 0 : index
    %382 = vector.load %arg11[%381, %c0_125, %c0_126] : memref<8x8x64xf32, #tpu.memory_space<vmem>>, vector<1x8x64xf32>
    %383 = vector.shape_cast %382 : vector<1x8x64xf32> to vector<8x64xf32>
    %384 = arith.truncf %376 : vector<8x16xf32> to vector<8x16xbf16>
    %c0_127 = arith.constant 0 : index
    %c0_128 = arith.constant 0 : index
    %385 = vector.load %arg6[%c0_127, %c0_128] : memref<16x64xbf16, #tpu.memory_space<vmem>>, vector<16x64xbf16>
    %cst_129 = arith.constant dense<0.000000e+00> : vector<8x64xf32>
    %386 = tpu.matmul %384, %385, %cst_129 {dimension_numbers = #tpu.dot_dimension_numbers<[1], [0], [0], [1], [0, 0, 1, 1], [], []>} : vector<8x16xbf16>, vector<16x64xbf16>, vector<8x64xf32> -> vector<8x64xf32>
    %387 = arith.addf %383, %386 : vector<8x64xf32>
    %388 = vector.extract_strided_slice %387 {offsets = [0, 0], sizes = [8, 16], strides = [1, 1]} : vector<8x64xf32> to vector<8x16xf32>
    %389 = arith.negf %388 : vector<8x16xf32>
    %390 = math.exp %389 : vector<8x16xf32>
    %cst_130 = arith.constant 1.000000e+00 : f32
    %391 = vector.broadcast %cst_130 : f32 to vector<8x16xf32>
    %392 = arith.addf %391, %390 : vector<8x16xf32>
    %393 = arith.divf %391, %392 : vector<8x16xf32>
    %394 = vector.extract_strided_slice %387 {offsets = [0, 16], sizes = [8, 16], strides = [1, 1]} : vector<8x64xf32> to vector<8x16xf32>
    %395 = arith.negf %394 : vector<8x16xf32>
    %396 = math.exp %395 : vector<8x16xf32>
    %cst_131 = arith.constant 1.000000e+00 : f32
    %397 = vector.broadcast %cst_131 : f32 to vector<8x16xf32>
    %398 = arith.addf %397, %396 : vector<8x16xf32>
    %399 = arith.divf %397, %398 : vector<8x16xf32>
    %400 = vector.extract_strided_slice %387 {offsets = [0, 32], sizes = [8, 16], strides = [1, 1]} : vector<8x64xf32> to vector<8x16xf32>
    %401 = math.tanh %400 : vector<8x16xf32>
    %402 = vector.extract_strided_slice %387 {offsets = [0, 48], sizes = [8, 16], strides = [1, 1]} : vector<8x64xf32> to vector<8x16xf32>
    %403 = arith.negf %402 : vector<8x16xf32>
    %404 = math.exp %403 : vector<8x16xf32>
    %cst_132 = arith.constant 1.000000e+00 : f32
    %405 = vector.broadcast %cst_132 : f32 to vector<8x16xf32>
    %406 = arith.addf %405, %404 : vector<8x16xf32>
    %407 = arith.divf %405, %406 : vector<8x16xf32>
    %408 = arith.mulf %399, %374 : vector<8x16xf32>
    %409 = arith.mulf %393, %401 : vector<8x16xf32>
    %410 = arith.addf %408, %409 : vector<8x16xf32>
    %411 = math.tanh %410 : vector<8x16xf32>
    %412 = arith.mulf %407, %411 : vector<8x16xf32>
    %413 = arith.index_cast %c2_i32_124 : i32 to index
    %c0_133 = arith.constant 0 : index
    %c0_134 = arith.constant 0 : index
    %414 = vector.load %arg12[%413, %c0_133, %c0_134] : memref<8x8x16xf32, #tpu.memory_space<vmem>>, vector<1x8x16xf32>
    %415 = vector.shape_cast %414 : vector<1x8x16xf32> to vector<8x16xf32>
    %416 = vector.shape_cast %412 : vector<8x16xf32> to vector<1x8x16xf32>
    tpu.vector_store %arg12[%413, %c0_133, %c0_134], %416 {strides = array<i32>} : memref<8x8x16xf32, #tpu.memory_space<vmem>>, vector<1x8x16xf32>,
    %c3_i32_135 = arith.constant 3 : i32
    %417 = arith.index_cast %c3_i32_135 : i32 to index
    %c0_136 = arith.constant 0 : index
    %c0_137 = arith.constant 0 : index
    %418 = vector.load %arg11[%417, %c0_136, %c0_137] : memref<8x8x64xf32, #tpu.memory_space<vmem>>, vector<1x8x64xf32>
    %419 = vector.shape_cast %418 : vector<1x8x64xf32> to vector<8x64xf32>
    %420 = arith.truncf %412 : vector<8x16xf32> to vector<8x16xbf16>
    %c0_138 = arith.constant 0 : index
    %c0_139 = arith.constant 0 : index
    %421 = vector.load %arg6[%c0_138, %c0_139] : memref<16x64xbf16, #tpu.memory_space<vmem>>, vector<16x64xbf16>
    %cst_140 = arith.constant dense<0.000000e+00> : vector<8x64xf32>
    %422 = tpu.matmul %420, %421, %cst_140 {dimension_numbers = #tpu.dot_dimension_numbers<[1], [0], [0], [1], [0, 0, 1, 1], [], []>} : vector<8x16xbf16>, vector<16x64xbf16>, vector<8x64xf32> -> vector<8x64xf32>
    %423 = arith.addf %419, %422 : vector<8x64xf32>
    %424 = vector.extract_strided_slice %423 {offsets = [0, 0], sizes = [8, 16], strides = [1, 1]} : vector<8x64xf32> to vector<8x16xf32>
    %425 = arith.negf %424 : vector<8x16xf32>
    %426 = math.exp %425 : vector<8x16xf32>
    %cst_141 = arith.constant 1.000000e+00 : f32
    %427 = vector.broadcast %cst_141 : f32 to vector<8x16xf32>
    %428 = arith.addf %427, %426 : vector<8x16xf32>
    %429 = arith.divf %427, %428 : vector<8x16xf32>
    %430 = vector.extract_strided_slice %423 {offsets = [0, 16], sizes = [8, 16], strides = [1, 1]} : vector<8x64xf32> to vector<8x16xf32>
    %431 = arith.negf %430 : vector<8x16xf32>
    %432 = math.exp %431 : vector<8x16xf32>
    %cst_142 = arith.constant 1.000000e+00 : f32
    %433 = vector.broadcast %cst_142 : f32 to vector<8x16xf32>
    %434 = arith.addf %433, %432 : vector<8x16xf32>
    %435 = arith.divf %433, %434 : vector<8x16xf32>
    %436 = vector.extract_strided_slice %423 {offsets = [0, 32], sizes = [8, 16], strides = [1, 1]} : vector<8x64xf32> to vector<8x16xf32>
    %437 = math.tanh %436 : vector<8x16xf32>
    %438 = vector.extract_strided_slice %423 {offsets = [0, 48], sizes = [8, 16], strides = [1, 1]} : vector<8x64xf32> to vector<8x16xf32>
    %439 = arith.negf %438 : vector<8x16xf32>
    %440 = math.exp %439 : vector<8x16xf32>
    %cst_143 = arith.constant 1.000000e+00 : f32
    %441 = vector.broadcast %cst_143 : f32 to vector<8x16xf32>
    %442 = arith.addf %441, %440 : vector<8x16xf32>
    %443 = arith.divf %441, %442 : vector<8x16xf32>
    %444 = arith.mulf %435, %410 : vector<8x16xf32>
    %445 = arith.mulf %429, %437 : vector<8x16xf32>
    %446 = arith.addf %444, %445 : vector<8x16xf32>
    %447 = math.tanh %446 : vector<8x16xf32>
    %448 = arith.mulf %443, %447 : vector<8x16xf32>
    %449 = arith.index_cast %c3_i32_135 : i32 to index
    %c0_144 = arith.constant 0 : index
    %c0_145 = arith.constant 0 : index
    %450 = vector.load %arg12[%449, %c0_144, %c0_145] : memref<8x8x16xf32, #tpu.memory_space<vmem>>, vector<1x8x16xf32>
    %451 = vector.shape_cast %450 : vector<1x8x16xf32> to vector<8x16xf32>
    %452 = vector.shape_cast %448 : vector<8x16xf32> to vector<1x8x16xf32>
    tpu.vector_store %arg12[%449, %c0_144, %c0_145], %452 {strides = array<i32>} : memref<8x8x16xf32, #tpu.memory_space<vmem>>, vector<1x8x16xf32>,
    %c4_i32_146 = arith.constant 4 : i32
    %453 = arith.index_cast %c4_i32_146 : i32 to index
    %c0_147 = arith.constant 0 : index
    %c0_148 = arith.constant 0 : index
    %454 = vector.load %arg11[%453, %c0_147, %c0_148] : memref<8x8x64xf32, #tpu.memory_space<vmem>>, vector<1x8x64xf32>
    %455 = vector.shape_cast %454 : vector<1x8x64xf32> to vector<8x64xf32>
    %456 = arith.truncf %448 : vector<8x16xf32> to vector<8x16xbf16>
    %c0_149 = arith.constant 0 : index
    %c0_150 = arith.constant 0 : index
    %457 = vector.load %arg6[%c0_149, %c0_150] : memref<16x64xbf16, #tpu.memory_space<vmem>>, vector<16x64xbf16>
    %cst_151 = arith.constant dense<0.000000e+00> : vector<8x64xf32>
    %458 = tpu.matmul %456, %457, %cst_151 {dimension_numbers = #tpu.dot_dimension_numbers<[1], [0], [0], [1], [0, 0, 1, 1], [], []>} : vector<8x16xbf16>, vector<16x64xbf16>, vector<8x64xf32> -> vector<8x64xf32>
    %459 = arith.addf %455, %458 : vector<8x64xf32>
    %460 = vector.extract_strided_slice %459 {offsets = [0, 0], sizes = [8, 16], strides = [1, 1]} : vector<8x64xf32> to vector<8x16xf32>
    %461 = arith.negf %460 : vector<8x16xf32>
    %462 = math.exp %461 : vector<8x16xf32>
    %cst_152 = arith.constant 1.000000e+00 : f32
    %463 = vector.broadcast %cst_152 : f32 to vector<8x16xf32>
    %464 = arith.addf %463, %462 : vector<8x16xf32>
    %465 = arith.divf %463, %464 : vector<8x16xf32>
    %466 = vector.extract_strided_slice %459 {offsets = [0, 16], sizes = [8, 16], strides = [1, 1]} : vector<8x64xf32> to vector<8x16xf32>
    %467 = arith.negf %466 : vector<8x16xf32>
    %468 = math.exp %467 : vector<8x16xf32>
    %cst_153 = arith.constant 1.000000e+00 : f32
    %469 = vector.broadcast %cst_153 : f32 to vector<8x16xf32>
    %470 = arith.addf %469, %468 : vector<8x16xf32>
    %471 = arith.divf %469, %470 : vector<8x16xf32>
    %472 = vector.extract_strided_slice %459 {offsets = [0, 32], sizes = [8, 16], strides = [1, 1]} : vector<8x64xf32> to vector<8x16xf32>
    %473 = math.tanh %472 : vector<8x16xf32>
    %474 = vector.extract_strided_slice %459 {offsets = [0, 48], sizes = [8, 16], strides = [1, 1]} : vector<8x64xf32> to vector<8x16xf32>
    %475 = arith.negf %474 : vector<8x16xf32>
    %476 = math.exp %475 : vector<8x16xf32>
    %cst_154 = arith.constant 1.000000e+00 : f32
    %477 = vector.broadcast %cst_154 : f32 to vector<8x16xf32>
    %478 = arith.addf %477, %476 : vector<8x16xf32>
    %479 = arith.divf %477, %478 : vector<8x16xf32>
    %480 = arith.mulf %471, %446 : vector<8x16xf32>
    %481 = arith.mulf %465, %473 : vector<8x16xf32>
    %482 = arith.addf %480, %481 : vector<8x16xf32>
    %483 = math.tanh %482 : vector<8x16xf32>
    %484 = arith.mulf %479, %483 : vector<8x16xf32>
    %485 = arith.index_cast %c4_i32_146 : i32 to index
    %c0_155 = arith.constant 0 : index
    %c0_156 = arith.constant 0 : index
    %486 = vector.load %arg12[%485, %c0_155, %c0_156] : memref<8x8x16xf32, #tpu.memory_space<vmem>>, vector<1x8x16xf32>
    %487 = vector.shape_cast %486 : vector<1x8x16xf32> to vector<8x16xf32>
    %488 = vector.shape_cast %484 : vector<8x16xf32> to vector<1x8x16xf32>
    tpu.vector_store %arg12[%485, %c0_155, %c0_156], %488 {strides = array<i32>} : memref<8x8x16xf32, #tpu.memory_space<vmem>>, vector<1x8x16xf32>,
    %c5_i32_157 = arith.constant 5 : i32
    %489 = arith.index_cast %c5_i32_157 : i32 to index
    %c0_158 = arith.constant 0 : index
    %c0_159 = arith.constant 0 : index
    %490 = vector.load %arg11[%489, %c0_158, %c0_159] : memref<8x8x64xf32, #tpu.memory_space<vmem>>, vector<1x8x64xf32>
    %491 = vector.shape_cast %490 : vector<1x8x64xf32> to vector<8x64xf32>
    %492 = arith.truncf %484 : vector<8x16xf32> to vector<8x16xbf16>
    %c0_160 = arith.constant 0 : index
    %c0_161 = arith.constant 0 : index
    %493 = vector.load %arg6[%c0_160, %c0_161] : memref<16x64xbf16, #tpu.memory_space<vmem>>, vector<16x64xbf16>
    %cst_162 = arith.constant dense<0.000000e+00> : vector<8x64xf32>
    %494 = tpu.matmul %492, %493, %cst_162 {dimension_numbers = #tpu.dot_dimension_numbers<[1], [0], [0], [1], [0, 0, 1, 1], [], []>} : vector<8x16xbf16>, vector<16x64xbf16>, vector<8x64xf32> -> vector<8x64xf32>
    %495 = arith.addf %491, %494 : vector<8x64xf32>
    %496 = vector.extract_strided_slice %495 {offsets = [0, 0], sizes = [8, 16], strides = [1, 1]} : vector<8x64xf32> to vector<8x16xf32>
    %497 = arith.negf %496 : vector<8x16xf32>
    %498 = math.exp %497 : vector<8x16xf32>
    %cst_163 = arith.constant 1.000000e+00 : f32
    %499 = vector.broadcast %cst_163 : f32 to vector<8x16xf32>
    %500 = arith.addf %499, %498 : vector<8x16xf32>
    %501 = arith.divf %499, %500 : vector<8x16xf32>
    %502 = vector.extract_strided_slice %495 {offsets = [0, 16], sizes = [8, 16], strides = [1, 1]} : vector<8x64xf32> to vector<8x16xf32>
    %503 = arith.negf %502 : vector<8x16xf32>
    %504 = math.exp %503 : vector<8x16xf32>
    %cst_164 = arith.constant 1.000000e+00 : f32
    %505 = vector.broadcast %cst_164 : f32 to vector<8x16xf32>
    %506 = arith.addf %505, %504 : vector<8x16xf32>
    %507 = arith.divf %505, %506 : vector<8x16xf32>
    %508 = vector.extract_strided_slice %495 {offsets = [0, 32], sizes = [8, 16], strides = [1, 1]} : vector<8x64xf32> to vector<8x16xf32>
    %509 = math.tanh %508 : vector<8x16xf32>
    %510 = vector.extract_strided_slice %495 {offsets = [0, 48], sizes = [8, 16], strides = [1, 1]} : vector<8x64xf32> to vector<8x16xf32>
    %511 = arith.negf %510 : vector<8x16xf32>
    %512 = math.exp %511 : vector<8x16xf32>
    %cst_165 = arith.constant 1.000000e+00 : f32
    %513 = vector.broadcast %cst_165 : f32 to vector<8x16xf32>
    %514 = arith.addf %513, %512 : vector<8x16xf32>
    %515 = arith.divf %513, %514 : vector<8x16xf32>
    %516 = arith.mulf %507, %482 : vector<8x16xf32>
    %517 = arith.mulf %501, %509 : vector<8x16xf32>
    %518 = arith.addf %516, %517 : vector<8x16xf32>
    %519 = math.tanh %518 : vector<8x16xf32>
    %520 = arith.mulf %515, %519 : vector<8x16xf32>
    %521 = arith.index_cast %c5_i32_157 : i32 to index
    %c0_166 = arith.constant 0 : index
    %c0_167 = arith.constant 0 : index
    %522 = vector.load %arg12[%521, %c0_166, %c0_167] : memref<8x8x16xf32, #tpu.memory_space<vmem>>, vector<1x8x16xf32>
    %523 = vector.shape_cast %522 : vector<1x8x16xf32> to vector<8x16xf32>
    %524 = vector.shape_cast %520 : vector<8x16xf32> to vector<1x8x16xf32>
    tpu.vector_store %arg12[%521, %c0_166, %c0_167], %524 {strides = array<i32>} : memref<8x8x16xf32, #tpu.memory_space<vmem>>, vector<1x8x16xf32>,
    %c6_i32_168 = arith.constant 6 : i32
    %525 = arith.index_cast %c6_i32_168 : i32 to index
    %c0_169 = arith.constant 0 : index
    %c0_170 = arith.constant 0 : index
    %526 = vector.load %arg11[%525, %c0_169, %c0_170] : memref<8x8x64xf32, #tpu.memory_space<vmem>>, vector<1x8x64xf32>
    %527 = vector.shape_cast %526 : vector<1x8x64xf32> to vector<8x64xf32>
    %528 = arith.truncf %520 : vector<8x16xf32> to vector<8x16xbf16>
    %c0_171 = arith.constant 0 : index
    %c0_172 = arith.constant 0 : index
    %529 = vector.load %arg6[%c0_171, %c0_172] : memref<16x64xbf16, #tpu.memory_space<vmem>>, vector<16x64xbf16>
    %cst_173 = arith.constant dense<0.000000e+00> : vector<8x64xf32>
    %530 = tpu.matmul %528, %529, %cst_173 {dimension_numbers = #tpu.dot_dimension_numbers<[1], [0], [0], [1], [0, 0, 1, 1], [], []>} : vector<8x16xbf16>, vector<16x64xbf16>, vector<8x64xf32> -> vector<8x64xf32>
    %531 = arith.addf %527, %530 : vector<8x64xf32>
    %532 = vector.extract_strided_slice %531 {offsets = [0, 0], sizes = [8, 16], strides = [1, 1]} : vector<8x64xf32> to vector<8x16xf32>
    %533 = arith.negf %532 : vector<8x16xf32>
    %534 = math.exp %533 : vector<8x16xf32>
    %cst_174 = arith.constant 1.000000e+00 : f32
    %535 = vector.broadcast %cst_174 : f32 to vector<8x16xf32>
    %536 = arith.addf %535, %534 : vector<8x16xf32>
    %537 = arith.divf %535, %536 : vector<8x16xf32>
    %538 = vector.extract_strided_slice %531 {offsets = [0, 16], sizes = [8, 16], strides = [1, 1]} : vector<8x64xf32> to vector<8x16xf32>
    %539 = arith.negf %538 : vector<8x16xf32>
    %540 = math.exp %539 : vector<8x16xf32>
    %cst_175 = arith.constant 1.000000e+00 : f32
    %541 = vector.broadcast %cst_175 : f32 to vector<8x16xf32>
    %542 = arith.addf %541, %540 : vector<8x16xf32>
    %543 = arith.divf %541, %542 : vector<8x16xf32>
    %544 = vector.extract_strided_slice %531 {offsets = [0, 32], sizes = [8, 16], strides = [1, 1]} : vector<8x64xf32> to vector<8x16xf32>
    %545 = math.tanh %544 : vector<8x16xf32>
    %546 = vector.extract_strided_slice %531 {offsets = [0, 48], sizes = [8, 16], strides = [1, 1]} : vector<8x64xf32> to vector<8x16xf32>
    %547 = arith.negf %546 : vector<8x16xf32>
    %548 = math.exp %547 : vector<8x16xf32>
    %cst_176 = arith.constant 1.000000e+00 : f32
    %549 = vector.broadcast %cst_176 : f32 to vector<8x16xf32>
    %550 = arith.addf %549, %548 : vector<8x16xf32>
    %551 = arith.divf %549, %550 : vector<8x16xf32>
    %552 = arith.mulf %543, %518 : vector<8x16xf32>
    %553 = arith.mulf %537, %545 : vector<8x16xf32>
    %554 = arith.addf %552, %553 : vector<8x16xf32>
    %555 = math.tanh %554 : vector<8x16xf32>
    %556 = arith.mulf %551, %555 : vector<8x16xf32>
    %557 = arith.index_cast %c6_i32_168 : i32 to index
    %c0_177 = arith.constant 0 : index
    %c0_178 = arith.constant 0 : index
    %558 = vector.load %arg12[%557, %c0_177, %c0_178] : memref<8x8x16xf32, #tpu.memory_space<vmem>>, vector<1x8x16xf32>
    %559 = vector.shape_cast %558 : vector<1x8x16xf32> to vector<8x16xf32>
    %560 = vector.shape_cast %556 : vector<8x16xf32> to vector<1x8x16xf32>
    tpu.vector_store %arg12[%557, %c0_177, %c0_178], %560 {strides = array<i32>} : memref<8x8x16xf32, #tpu.memory_space<vmem>>, vector<1x8x16xf32>,
    %c7_i32_179 = arith.constant 7 : i32
    %561 = arith.index_cast %c7_i32_179 : i32 to index
    %c0_180 = arith.constant 0 : index
    %c0_181 = arith.constant 0 : index
    %562 = vector.load %arg11[%561, %c0_180, %c0_181] : memref<8x8x64xf32, #tpu.memory_space<vmem>>, vector<1x8x64xf32>
    %563 = vector.shape_cast %562 : vector<1x8x64xf32> to vector<8x64xf32>
    %564 = arith.truncf %556 : vector<8x16xf32> to vector<8x16xbf16>
    %c0_182 = arith.constant 0 : index
    %c0_183 = arith.constant 0 : index
    %565 = vector.load %arg6[%c0_182, %c0_183] : memref<16x64xbf16, #tpu.memory_space<vmem>>, vector<16x64xbf16>
    %cst_184 = arith.constant dense<0.000000e+00> : vector<8x64xf32>
    %566 = tpu.matmul %564, %565, %cst_184 {dimension_numbers = #tpu.dot_dimension_numbers<[1], [0], [0], [1], [0, 0, 1, 1], [], []>} : vector<8x16xbf16>, vector<16x64xbf16>, vector<8x64xf32> -> vector<8x64xf32>
    %567 = arith.addf %563, %566 : vector<8x64xf32>
    %568 = vector.extract_strided_slice %567 {offsets = [0, 0], sizes = [8, 16], strides = [1, 1]} : vector<8x64xf32> to vector<8x16xf32>
    %569 = arith.negf %568 : vector<8x16xf32>
    %570 = math.exp %569 : vector<8x16xf32>
    %cst_185 = arith.constant 1.000000e+00 : f32
    %571 = vector.broadcast %cst_185 : f32 to vector<8x16xf32>
    %572 = arith.addf %571, %570 : vector<8x16xf32>
    %573 = arith.divf %571, %572 : vector<8x16xf32>
    %574 = vector.extract_strided_slice %567 {offsets = [0, 16], sizes = [8, 16], strides = [1, 1]} : vector<8x64xf32> to vector<8x16xf32>
    %575 = arith.negf %574 : vector<8x16xf32>
    %576 = math.exp %575 : vector<8x16xf32>
    %cst_186 = arith.constant 1.000000e+00 : f32
    %577 = vector.broadcast %cst_186 : f32 to vector<8x16xf32>
    %578 = arith.addf %577, %576 : vector<8x16xf32>
    %579 = arith.divf %577, %578 : vector<8x16xf32>
    %580 = vector.extract_strided_slice %567 {offsets = [0, 32], sizes = [8, 16], strides = [1, 1]} : vector<8x64xf32> to vector<8x16xf32>
    %581 = math.tanh %580 : vector<8x16xf32>
    %582 = vector.extract_strided_slice %567 {offsets = [0, 48], sizes = [8, 16], strides = [1, 1]} : vector<8x64xf32> to vector<8x16xf32>
    %583 = arith.negf %582 : vector<8x16xf32>
    %584 = math.exp %583 : vector<8x16xf32>
    %cst_187 = arith.constant 1.000000e+00 : f32
    %585 = vector.broadcast %cst_187 : f32 to vector<8x16xf32>
    %586 = arith.addf %585, %584 : vector<8x16xf32>
    %587 = arith.divf %585, %586 : vector<8x16xf32>
    %588 = arith.mulf %579, %554 : vector<8x16xf32>
    %589 = arith.mulf %573, %581 : vector<8x16xf32>
    %590 = arith.addf %588, %589 : vector<8x16xf32>
    %591 = math.tanh %590 : vector<8x16xf32>
    %592 = arith.mulf %587, %591 : vector<8x16xf32>
    %593 = arith.index_cast %c7_i32_179 : i32 to index
    %c0_188 = arith.constant 0 : index
    %c0_189 = arith.constant 0 : index
    %594 = vector.load %arg12[%593, %c0_188, %c0_189] : memref<8x8x16xf32, #tpu.memory_space<vmem>>, vector<1x8x16xf32>
    %595 = vector.shape_cast %594 : vector<1x8x16xf32> to vector<8x16xf32>
    %596 = vector.shape_cast %592 : vector<8x16xf32> to vector<1x8x16xf32>
    tpu.vector_store %arg12[%593, %c0_188, %c0_189], %596 {strides = array<i32>} : memref<8x8x16xf32, #tpu.memory_space<vmem>>, vector<1x8x16xf32>,
    %c8_i32_190 = arith.constant 8 : i32
    %c0_191 = arith.constant 0 : index
    %c0_192 = arith.constant 0 : index
    %c0_193 = arith.constant 0 : index
    %597 = vector.load %arg12[%c0_191, %c0_192, %c0_193] : memref<8x8x16xf32, #tpu.memory_space<vmem>>, vector<8x8x16xf32>
    %598 = vector.shape_cast %597 : vector<8x8x16xf32> to vector<64x16xf32>
    %599 = arith.truncf %598 : vector<64x16xf32> to vector<64x16xbf16>
    %c0_194 = arith.constant 0 : index
    %c0_195 = arith.constant 0 : index
    %600 = vector.load %arg8[%c0_194, %c0_195] : memref<16x4xbf16, #tpu.memory_space<vmem>>, vector<16x4xbf16>
    %cst_196 = arith.constant dense<0.000000e+00> : vector<64x4xf32>
    %601 = tpu.matmul %599, %600, %cst_196 {dimension_numbers = #tpu.dot_dimension_numbers<[1], [0], [0], [1], [0, 0, 1, 1], [], []>} : vector<64x16xbf16>, vector<16x4xbf16>, vector<64x4xf32> -> vector<64x4xf32>
    %c0_197 = arith.constant 0 : index
    %c0_198 = arith.constant 0 : index
    %602 = vector.load %arg9[%c0_197, %c0_198] : memref<1x4xf32, #tpu.memory_space<vmem>>, vector<1x4xf32>
    %603 = vector.broadcast %602 : vector<1x4xf32> to vector<64x4xf32>
    %604 = arith.addf %601, %603 : vector<64x4xf32>
    %605 = vector.shape_cast %604 : vector<64x4xf32> to vector<8x8x4xf32>
    %c0_199 = arith.constant 0 : index
    %c0_200 = arith.constant 0 : index
    %c0_201 = arith.constant 0 : index
    %606 = vector.load %arg10[%c0_199, %c0_200, %c0_201] : memref<8x8x4xf32, #tpu.memory_space<vmem>>, vector<8x8x4xf32>
    tpu.vector_store %arg10[%c0_199, %c0_200, %c0_201], %605 {strides = array<i32>} : memref<8x8x4xf32, #tpu.memory_space<vmem>>, vector<8x8x4xf32>,
    return
  }
  func.func @transform_0(%arg0: i32) -> (i32, i32, i32) {
    %c0_i32 = arith.constant 0 : i32
    %c0_i32_0 = arith.constant 0 : i32
    %c0_i32_1 = arith.constant 0 : i32
    return %c0_i32, %arg0, %c0_i32_0 : i32, i32, i32
  }
  func.func @transform_1(%arg0: i32) -> (i32, i32) {
    %c0_i32 = arith.constant 0 : i32
    %c0_i32_0 = arith.constant 0 : i32
    %c0_i32_1 = arith.constant 0 : i32
    return %c0_i32, %c0_i32_0 : i32, i32
  }
  func.func @transform_2(%arg0: i32) -> (i32, i32) {
    %c0_i32 = arith.constant 0 : i32
    %c0_i32_0 = arith.constant 0 : i32
    %c0_i32_1 = arith.constant 0 : i32
    return %c0_i32, %c0_i32_0 : i32, i32
  }
  func.func @transform_3(%arg0: i32) -> (i32, i32) {
    %c0_i32 = arith.constant 0 : i32
    %c0_i32_0 = arith.constant 0 : i32
    %c0_i32_1 = arith.constant 0 : i32
    return %c0_i32, %c0_i32_0 : i32, i32
  }
  func.func @transform_4(%arg0: i32) -> (i32, i32) {
    %c0_i32 = arith.constant 0 : i32
    %c0_i32_0 = arith.constant 0 : i32
    %c0_i32_1 = arith.constant 0 : i32
    return %c0_i32, %c0_i32_0 : i32, i32
  }
  func.func @transform_5(%arg0: i32) -> (i32, i32) {
    %c0_i32 = arith.constant 0 : i32
    %c0_i32_0 = arith.constant 0 : i32
    %c0_i32_1 = arith.constant 0 : i32
    return %c0_i32, %c0_i32_0 : i32, i32
  }
  func.func @transform_6(%arg0: i32) -> (i32, i32) {
    %c0_i32 = arith.constant 0 : i32
    %c0_i32_0 = arith.constant 0 : i32
    %c0_i32_1 = arith.constant 0 : i32
    return %c0_i32, %c0_i32_0 : i32, i32
  }
  func.func @transform_7(%arg0: i32) -> (i32, i32) {
    %c0_i32 = arith.constant 0 : i32
    %c0_i32_0 = arith.constant 0 : i32
    %c0_i32_1 = arith.constant 0 : i32
    return %c0_i32, %c0_i32_0 : i32, i32
  }
  func.func @transform_8(%arg0: i32) -> (i32, i32) {
    %c0_i32 = arith.constant 0 : i32
    %c0_i32_0 = arith.constant 0 : i32
    %c0_i32_1 = arith.constant 0 : i32
    return %c0_i32, %c0_i32_0 : i32, i32
  }
  func.func @transform_9(%arg0: i32) -> (i32, i32, i32) {
    %c0_i32 = arith.constant 0 : i32
    %c0_i32_0 = arith.constant 0 : i32
    %c0_i32_1 = arith.constant 0 : i32
    return %c0_i32, %arg0, %c0_i32_0 : i32, i32, i32
  }
}

</mosaic_0001>

<llo_original>
// kernel: tpu_custom_call.1
$region0: #{tpu_custom_call.1}
  #allocation0 [shape = 'u32[]', space=smem, size = 0x4, offset = 0x4, fixed_abs, tag = 'smem constant byte address 0x4 - core index']
  #allocation1 [shape = 'u32[144,128]{1,0:T(1,128)}', space=vmem, size = 0x12000, scoped, tag = 'internal scratch']
  #allocation2 [shape = 'f32[8,8,64]{2,1,0:T(8,128)}', space=vmem, size = 0x8000, scoped, tag = 'scratch operand']
  #allocation3 [shape = 'f32[8,8,16]{2,1,0:T(8,128)}', space=vmem, size = 0x8000, scoped, tag = 'scratch operand']
  %s0 = inlined_call_operand.hbm [shape: bf16[8,8,16], index: 0, kind: input, shape index: {}]
  %s1 = inlined_call_operand.vmem [shape: bf16[16,64], index: 1, kind: input, shape index: {}]
  %s2 = inlined_call_operand.vmem [shape: bf16[16,64], index: 2, kind: input, shape index: {}]
  %s3 = inlined_call_operand.vmem [shape: f32[1,64], index: 3, kind: input, shape index: {}]
  %s4 = inlined_call_operand.vmem [shape: bf16[16,64], index: 4, kind: input, shape index: {}]
  %s5 = inlined_call_operand.hbm [shape: bf16[16,64], index: 5, kind: input, shape index: {}]
  %s6 = inlined_call_operand.vmem [shape: f32[1,64], index: 6, kind: input, shape index: {}]
  %s7 = inlined_call_operand.vmem [shape: bf16[16,4], index: 7, kind: input, shape index: {}]
  %s8 = inlined_call_operand.vmem [shape: f32[1,4], index: 8, kind: input, shape index: {}]
  %s9 = inlined_call_operand.vmem [shape: f32[8,8,4], index: 9, kind: output, shape index: {}]
  %s10 = sld [smem:[#allocation0]]
  $region54: #{tpu_custom_call.1} parent=0
    _
  %s12 = ssub.s32 1, %s10
  %s13 = scalar_select 0, %s12, %s10
  $region1: #{tpu_custom_call.1} parent=0
    #allocation4 [shape = 'u8[16384]{0}', space=vmem, size = 0x4000, scoped, tag = 'input window, operand 0, single buffered']
    #allocation5 [shape = 's32[1]{0}', space=sflag, size = 0x4, scoped, tag = 'scoped memory for tpu_custom_call.1']
    #allocation6 [shape = 'u8[4096]{0}', space=vmem, size = 0x1000, scoped, tag = 'input window, operand 5, single buffered']
    #allocation7 [shape = 's32[1]{0}', space=sflag, size = 0x4, scoped, tag = 'scoped memory for tpu_custom_call.1']
    %14 = vsyncpa [#allocation5], 0
    %15 = vsyncpa [#allocation7], 0
    // Predicated region
    $region2: #{tpu_custom_call.1} parent=1 // pred_check
      _
    $region3: #{tpu_custom_call.1} parent=1 // pred_check_branch
      %17 = sbr.rel (0) target = $region5
    $region4: #{tpu_custom_call.1} parent=1 // pred_region
      %s19 = ssub.s32 512, 512
      %20 = vsyncadd [#allocation5], %s19
      %s21 = sshll.u32 [#allocation4], 4
      %s22 = int_to_ptr.vmem [resolvable:$true] %s21
      %27 = dma.hbm_to_vmem [thread:$0]  %s0, 512, %s22, [#allocation5], 64, 64, 4
    $region5: #{tpu_custom_call.1} parent=1 // pred_fallthru
      _
    // Predicated region
    $region6: #{tpu_custom_call.1} parent=1 // pred_check
      _
    $region7: #{tpu_custom_call.1} parent=1 // pred_check_branch
      %29 = sbr.rel (0) target = $region9
    $region8: #{tpu_custom_call.1} parent=1 // pred_region
      _
    $region9: #{tpu_custom_call.1} parent=1 // pred_fallthru
      _
    // Predicated region
    $region10: #{tpu_custom_call.1} parent=1 // pred_check
      _
    $region11: #{tpu_custom_call.1} parent=1 // pred_check_branch
      %31 = sbr.rel (0) target = $region13
    $region12: #{tpu_custom_call.1} parent=1 // pred_region
      _
    $region13: #{tpu_custom_call.1} parent=1 // pred_fallthru
      _
    // Predicated region
    $region14: #{tpu_custom_call.1} parent=1 // pred_check
      _
    $region15: #{tpu_custom_call.1} parent=1 // pred_check_branch
      %33 = sbr.rel (0) target = $region17
    $region16: #{tpu_custom_call.1} parent=1 // pred_region
      _
    $region17: #{tpu_custom_call.1} parent=1 // pred_fallthru
      _
    // Predicated region
    $region18: #{tpu_custom_call.1} parent=1 // pred_check
      _
    $region19: #{tpu_custom_call.1} parent=1 // pred_check_branch
      %35 = sbr.rel (0) target = $region21
    $region20: #{tpu_custom_call.1} parent=1 // pred_region
      _
    $region21: #{tpu_custom_call.1} parent=1 // pred_fallthru
      _
    // Predicated region
    $region22: #{tpu_custom_call.1} parent=1 // pred_check
      _
    $region23: #{tpu_custom_call.1} parent=1 // pred_check_branch
      %37 = sbr.rel (0) target = $region25
    $region24: #{tpu_custom_call.1} parent=1 // pred_region
      %s39 = ssub.s32 128, 128
      %40 = vsyncadd [#allocation7], %s39
      %s41 = sshll.u32 [#allocation6], 4
      %s42 = int_to_ptr.vmem [resolvable:$true] %s41
      %47 = dma.hbm_to_vmem [thread:$0]  %s5, 128, %s42, [#allocation7], 64, 64, 4
    $region25: #{tpu_custom_call.1} parent=1 // pred_fallthru
      _
    // Predicated region
    $region26: #{tpu_custom_call.1} parent=1 // pred_check
      _
    $region27: #{tpu_custom_call.1} parent=1 // pred_check_branch
      %49 = sbr.rel (0) target = $region29
    $region28: #{tpu_custom_call.1} parent=1 // pred_region
      _
    $region29: #{tpu_custom_call.1} parent=1 // pred_fallthru
      _
    // Predicated region
    $region30: #{tpu_custom_call.1} parent=1 // pred_check
      _
    $region31: #{tpu_custom_call.1} parent=1 // pred_check_branch
      %51 = sbr.rel (0) target = $region33
    $region32: #{tpu_custom_call.1} parent=1 // pred_region
      _
    $region33: #{tpu_custom_call.1} parent=1 // pred_fallthru
      _
    // Predicated region
    $region34: #{tpu_custom_call.1} parent=1 // pred_check
      _
    $region35: #{tpu_custom_call.1} parent=1 // pred_check_branch
      %53 = sbr.rel (0) target = $region37
    $region36: #{tpu_custom_call.1} parent=1 // pred_region
      _
    $region37: #{tpu_custom_call.1} parent=1 // pred_fallthru
      _
    // Predicated region
    $region38: #{tpu_custom_call.1} parent=1 // pred_check
      _
    $region39: #{tpu_custom_call.1} parent=1 // pred_check_branch
      %55 = sbr.rel (0) target = $region41
    $region40: #{tpu_custom_call.1} parent=1 // pred_region
      %56 = dma.done [#allocation5], 512
    $region41: #{tpu_custom_call.1} parent=1 // pred_fallthru
      _
    // Predicated region
    $region42: #{tpu_custom_call.1} parent=1 // pred_check
      _
    $region43: #{tpu_custom_call.1} parent=1 // pred_check_branch
      %58 = sbr.rel (0) target = $region45
    $region44: #{tpu_custom_call.1} parent=1 // pred_region
      %59 = dma.done [#allocation7], 128
    $region45: #{tpu_custom_call.1} parent=1 // pred_fallthru
      _
    %v61 = vld [vmem:[#allocation4] sm:$0xf]
    %v62 = vld [vmem:[#allocation4 + $0x4] sm:$0xf]
    %v63 = vld [vmem:[#allocation4 + $0x8] sm:$0xf]
    %v64 = vld [vmem:[#allocation4 + $0xc] sm:$0xf]
    %v65 = vld [vmem:[#allocation4 + $0x10] sm:$0xf]
    %v66 = vld [vmem:[#allocation4 + $0x14] sm:$0xf]
    %v67 = vld [vmem:[#allocation4 + $0x18] sm:$0xf]
    %v68 = vld [vmem:[#allocation4 + $0x1c] sm:$0xf]
    %v69 = vld [vmem:[%s1] sm:$0xf]
    %v70 = vld [vmem:[%s1 + $0x4] sm:$0xf]
    %v71 = vld [vmem:[%s3] sm:$0x1]
    %v73 = vlaneseq
    %v74 = vshrl.u32 %v73, 7
    %v75 = vsub.s32 0, %v74
    %v76 = vrot.slane %v71, %v75
    %v86 = vunpack.c.l.b16 %v61
    %v87 = vunpack.c.l.b16 %v62
    %v88 = vunpack.c.l.b16 %v63
    %v89 = vunpack.c.l.b16 %v64
    %v90 = vunpack.c.l.b16 %v65
    %v91 = vunpack.c.l.b16 %v66
    %v92 = vunpack.c.l.b16 %v67
    %v93 = vunpack.c.l.b16 %v68
    %v94 = vpack.c.b16 %v87, %v86
    %v95 = vpack.c.b16 %v89, %v88
    %v96 = vpack.c.b16 %v91, %v90
    %v97 = vpack.c.b16 %v93, %v92
    %v100 = vunpack.c.l.b16 %v69
    %v101 = vunpack.c.l.b16 %v70
    %v102 = vpack.c.b16 %v101, %v100
    %vm104 = vcmask 130048
    %v106 = vsel %vm104, %v94, 0
    %v109 = vsel %vm104, %v95, 0
    %v112 = vsel %vm104, %v96, 0
    %v115 = vsel %vm104, %v97, 0
    %117 = vmatprep.subr.bf16.mxu0 0
    %118 = vmatpush1.bf16.msra.mxu0 %v102
    %119 = vmatprep.subr.bf16.mxu0 0
    %120 = vmatpush1.bf16.msra.mxu0 0
    %121 = vmatprep.subr.bf16.mxu0 0
    %122 = vmatpush1.bf16.msra.mxu0 0
    %123 = vmatprep.subr.bf16.mxu0 0
    %124 = vmatpush1.bf16.msra.mxu0 0
    %125 = vmatprep.subr.bf16.mxu0 0
    %126 = vmatpush1.bf16.msra.mxu0 0
    %127 = vmatprep.subr.bf16.mxu0 0
    %128 = vmatpush1.bf16.msra.mxu0 0
    %129 = vmatprep.subr.bf16.mxu0 0
    %130 = vmatpush1.bf16.msra.mxu0 0
    %131 = vmatprep.subr.bf16.mxu0 0
    %132 = vmatpush1.bf16.msra.mxu0 0
    %133 = vmatprep.subr.bf16.mxu0 0
    %134 = vmatpush1.bf16.msra.mxu0 0
    %135 = vmatprep.subr.bf16.mxu0 0
    %136 = vmatpush1.bf16.msra.mxu0 0
    %137 = vmatprep.subr.bf16.mxu0 0
    %138 = vmatpush1.bf16.msra.mxu0 0
    %139 = vmatprep.subr.bf16.mxu0 0
    %140 = vmatpush1.bf16.msra.mxu0 0
    %141 = vmatprep.subr.bf16.mxu0 0
    %142 = vmatpush1.bf16.msra.mxu0 0
    %143 = vmatprep.subr.bf16.mxu0 0
    %144 = vmatpush1.bf16.msra.mxu0 0
    %145 = vmatprep.subr.bf16.mxu0 0
    %146 = vmatpush1.bf16.msra.mxu0 0
    %147 = vmatprep.subr.bf16.mxu0 0
    %148 = vmatpush1.bf16.msra.mxu0 0
    %149 = vmatprep.mubr.bf16.mxu0 0
    %150 = vmatmul.mubr.bf16.gmra.mrb[0].mxu0 %v106
    %v151 = vpop.f32.mrb[0].mxu0
    %v152 = vadd.f32 %v76, %v151
    %v153 = vpop.f32.mrb[0].mxu0
    %v154 = vpop.f32.mrb[0].mxu0
    %v155 = vadd.f32 %v76, %v154
    %v156 = vpop.f32.mrb[0].mxu0
    %157 = vmatprep.mubr.bf16.mxu0 0
    %158 = vmatmul.mubr.bf16.gmra.mrb[0].mxu0 %v109
    %v159 = vpop.f32.mrb[0].mxu0
    %v160 = vadd.f32 %v76, %v159
    %v161 = vpop.f32.mrb[0].mxu0
    %v162 = vpop.f32.mrb[0].mxu0
    %v163 = vadd.f32 %v76, %v162
    %v164 = vpop.f32.mrb[0].mxu0
    %165 = vmatprep.mubr.bf16.mxu0 0
    %166 = vmatmul.mubr.bf16.gmra.mrb[0].mxu0 %v112
    %v167 = vpop.f32.mrb[0].mxu0
    %v168 = vadd.f32 %v76, %v167
    %v169 = vpop.f32.mrb[0].mxu0
    %v170 = vpop.f32.mrb[0].mxu0
    %v171 = vadd.f32 %v76, %v170
    %v172 = vpop.f32.mrb[0].mxu0
    %173 = vmatprep.mubr.bf16.mxu0 0
    %174 = vmatmul.mubr.bf16.gmra.mrb[0].mxu0 %v115
    %v175 = vpop.f32.mrb[0].mxu0
    %v176 = vadd.f32 %v76, %v175
    %v177 = vpop.f32.mrb[0].mxu0
    %v178 = vpop.f32.mrb[0].mxu0
    %v179 = vadd.f32 %v76, %v178
    %v180 = vpop.f32.mrb[0].mxu0
    %181 = vdwg.mxu0
    %vm182 = vcmask 523264
    %183 = vst.msk [vmem:[#allocation2] sm:$0xff] %vm182, %v152
    %184 = vst.msk [vmem:[#allocation2 + $0x8] sm:$0xff] %vm182, %v155
    %185 = vst.msk [vmem:[#allocation2 + $0x10] sm:$0xff] %vm182, %v160
    %186 = vst.msk [vmem:[#allocation2 + $0x18] sm:$0xff] %vm182, %v163
    %187 = vst.msk [vmem:[#allocation2 + $0x20] sm:$0xff] %vm182, %v168
    %188 = vst.msk [vmem:[#allocation2 + $0x28] sm:$0xff] %vm182, %v171
    %189 = vst.msk [vmem:[#allocation2 + $0x30] sm:$0xff] %vm182, %v176
    %190 = vst.msk [vmem:[#allocation2 + $0x38] sm:$0xff] %vm182, %v179
    %v191 = vld [vmem:[#allocation2] sm:$0xff]
    %v192 = vld [vmem:[%s2] sm:$0xf]
    %v193 = vld [vmem:[%s2 + $0x4] sm:$0xf]
    %v196 = vunpack.c.l.b16 %v192
    %v197 = vunpack.c.l.b16 %v193
    %v198 = vpack.c.b16 %v197, %v196
    %v201 = vsel %vm104, 0, 0
    %203 = vmatprep.subr.bf16.mxu0 0
    %204 = vmatpush1.bf16.msra.mxu0 %v198
    %205 = vmatprep.subr.bf16.mxu0 0
    %206 = vmatpush1.bf16.msra.mxu0 0
    %207 = vmatprep.subr.bf16.mxu0 0
    %208 = vmatpush1.bf16.msra.mxu0 0
    %209 = vmatprep.subr.bf16.mxu0 0
    %210 = vmatpush1.bf16.msra.mxu0 0
    %211 = vmatprep.subr.bf16.mxu0 0
    %212 = vmatpush1.bf16.msra.mxu0 0
    %213 = vmatprep.subr.bf16.mxu0 0
    %214 = vmatpush1.bf16.msra.mxu0 0
    %215 = vmatprep.subr.bf16.mxu0 0
    %216 = vmatpush1.bf16.msra.mxu0 0
    %217 = vmatprep.subr.bf16.mxu0 0
    %218 = vmatpush1.bf16.msra.mxu0 0
    %219 = vmatprep.subr.bf16.mxu0 0
    %220 = vmatpush1.bf16.msra.mxu0 0
    %221 = vmatprep.subr.bf16.mxu0 0
    %222 = vmatpush1.bf16.msra.mxu0 0
    %223 = vmatprep.subr.bf16.mxu0 0
    %224 = vmatpush1.bf16.msra.mxu0 0
    %225 = vmatprep.subr.bf16.mxu0 0
    %226 = vmatpush1.bf16.msra.mxu0 0
    %227 = vmatprep.subr.bf16.mxu0 0
    %228 = vmatpush1.bf16.msra.mxu0 0
    %229 = vmatprep.subr.bf16.mxu0 0
    %230 = vmatpush1.bf16.msra.mxu0 0
    %231 = vmatprep.subr.bf16.mxu0 0
    %232 = vmatpush1.bf16.msra.mxu0 0
    %233 = vmatprep.subr.bf16.mxu0 0
    %234 = vmatpush1.bf16.msra.mxu0 0
    %235 = vmatprep.mubr.bf16.mxu0 0
    %236 = vmatmul.mubr.bf16.gmra.mrb[0].mxu0 %v201
    %v237 = vpop.f32.mrb[0].mxu0
    %v238 = vadd.f32 0.0, %v237
    %v239 = vpop.f32.mrb[0].mxu0
    %v240 = vpop.f32.mrb[0].mxu0
    %v241 = vpop.f32.mrb[0].mxu0
    %242 = vdwg.mxu0
    %v243 = vadd.f32 %v191, %v238
    %v244 = vxor.u32 %v243, 2147483648
    %v245 = vmul.f32 %v244, 1.442695
    %v246 = vpow.pop %v245
    %v247 = vadd.f32 %v246, 1.0
    %v248 = vrcp.pop %v247
    %v249 = vmul.f32 1.0, %v248
    %v250 = vtanh.pop %v243
    %v251 = vmul.f32 %v249, 0.0
    %253 = vrot.lane.b32.xlu0 %v250, 96
    %v254 = vpop.permute.xlu0 %253
    %v256 = vmul.f32 %v249, %v254
    %258 = vrot.lane.b32.xlu0 %v256, 16
    %v259 = vpop.permute.xlu0 %258
    %v261 = vadd.f32 %v251, %v259
    %v262 = vtanh.pop %v261
    %264 = vrot.lane.b32.xlu0 %v262, 32
    %v265 = vpop.permute.xlu0 %264
    %v267 = vmul.f32 %v249, %v265
    %269 = vrot.lane.b32.xlu0 %v267, 80
    %v270 = vpop.permute.xlu0 %269
    %272 = vst.msk [vmem:[#allocation3] sm:$0xff] %vm104, %v270
    %s273 = scalar_lea.vmem [#allocation2], 8
    %v274 = vld [vmem:[%s273] sm:$0xff]
    %v275 = vpack.c.bf16 %v267, %v267
    %v276 = vld [vmem:[%s2] sm:$0xf]
    %v277 = vld [vmem:[%s2 + $0x4] sm:$0xf]
    %279 = vrot.lane.b32.xlu0 %v275, 80
    %v280 = vpop.permute.xlu0 %279
    %v283 = vunpack.c.l.b16 %v276
    %v284 = vunpack.c.l.b16 %v277
    %v285 = vpack.c.b16 %v284, %v283
    %v288 = vsel %vm104, %v280, 0
    %290 = vmatprep.subr.bf16.mxu0 0
    %291 = vmatpush1.bf16.msra.mxu0 %v285
    %292 = vmatprep.subr.bf16.mxu0 0
    %293 = vmatpush1.bf16.msra.mxu0 0
    %294 = vmatprep.subr.bf16.mxu0 0
    %295 = vmatpush1.bf16.msra.mxu0 0
    %296 = vmatprep.subr.bf16.mxu0 0
    %297 = vmatpush1.bf16.msra.mxu0 0
    %298 = vmatprep.subr.bf16.mxu0 0
    %299 = vmatpush1.bf16.msra.mxu0 0
    %300 = vmatprep.subr.bf16.mxu0 0
    %301 = vmatpush1.bf16.msra.mxu0 0
    %302 = vmatprep.subr.bf16.mxu0 0
    %303 = vmatpush1.bf16.msra.mxu0 0
    %304 = vmatprep.subr.bf16.mxu0 0
    %305 = vmatpush1.bf16.msra.mxu0 0
    %306 = vmatprep.subr.bf16.mxu0 0
    %307 = vmatpush1.bf16.msra.mxu0 0
    %308 = vmatprep.subr.bf16.mxu0 0
    %309 = vmatpush1.bf16.msra.mxu0 0
    %310 = vmatprep.subr.bf16.mxu0 0
    %311 = vmatpush1.bf16.msra.mxu0 0
    %312 = vmatprep.subr.bf16.mxu0 0
    %313 = vmatpush1.bf16.msra.mxu0 0
    %314 = vmatprep.subr.bf16.mxu0 0
    %315 = vmatpush1.bf16.msra.mxu0 0
    %316 = vmatprep.subr.bf16.mxu0 0
    %317 = vmatpush1.bf16.msra.mxu0 0
    %318 = vmatprep.subr.bf16.mxu0 0
    %319 = vmatpush1.bf16.msra.mxu0 0
    %320 = vmatprep.subr.bf16.mxu0 0
    %321 = vmatpush1.bf16.msra.mxu0 0
    %322 = vmatprep.mubr.bf16.mxu0 0
    %323 = vmatmul.mubr.bf16.gmra.mrb[0].mxu0 %v288
    %v324 = vpop.f32.mrb[0].mxu0
    %v325 = vadd.f32 0.0, %v324
    %v326 = vpop.f32.mrb[0].mxu0
    %v327 = vpop.f32.mrb[0].mxu0
    %v328 = vpop.f32.mrb[0].mxu0
    %329 = vdwg.mxu0
    %v330 = vadd.f32 %v274, %v325
    %v331 = vxor.u32 %v330, 2147483648
    %v332 = vmul.f32 %v331, 1.442695
    %v333 = vpow.pop %v332
    %v334 = vadd.f32 %v333, 1.0
    %v335 = vrcp.pop %v334
    %v336 = vmul.f32 1.0, %v335
    %v337 = vtanh.pop %v330
    %v338 = vmul.f32 %v336, %v261
    %340 = vrot.lane.b32.xlu0 %v337, 96
    %v341 = vpop.permute.xlu0 %340
    %v343 = vmul.f32 %v336, %v341
    %345 = vrot.lane.b32.xlu0 %v343, 16
    %v346 = vpop.permute.xlu0 %345
    %v348 = vadd.f32 %v338, %v346
    %v349 = vtanh.pop %v348
    %351 = vrot.lane.b32.xlu0 %v349, 32
    %v352 = vpop.permute.xlu0 %351
    %v354 = vmul.f32 %v336, %v352
    %356 = vrot.lane.b32.xlu0 %v354, 80
    %v357 = vpop.permute.xlu0 %356
    %s359 = scalar_lea.vmem [#allocation3], 8
    %360 = vst.msk [vmem:[%s359] sm:$0xff] %vm104, %v357
    %s361 = scalar_lea.vmem [#allocation2], 16
    %v362 = vld [vmem:[%s361] sm:$0xff]
    %v363 = vpack.c.bf16 %v354, %v354
    %v364 = vld [vmem:[%s2] sm:$0xf]
    %v365 = vld [vmem:[%s2 + $0x4] sm:$0xf]
    %367 = vrot.lane.b32.xlu0 %v363, 80
    %v368 = vpop.permute.xlu0 %367
    %v371 = vunpack.c.l.b16 %v364
    %v372 = vunpack.c.l.b16 %v365
    %v373 = vpack.c.b16 %v372, %v371
    %v376 = vsel %vm104, %v368, 0
    %378 = vmatprep.subr.bf16.mxu0 0
    %379 = vmatpush1.bf16.msra.mxu0 %v373
    %380 = vmatprep.subr.bf16.mxu0 0
    %381 = vmatpush1.bf16.msra.mxu0 0
    %382 = vmatprep.subr.bf16.mxu0 0
    %383 = vmatpush1.bf16.msra.mxu0 0
    %384 = vmatprep.subr.bf16.mxu0 0
    %385 = vmatpush1.bf16.msra.mxu0 0
    %386 = vmatprep.subr.bf16.mxu0 0
    %387 = vmatpush1.bf16.msra.mxu0 0
    %388 = vmatprep.subr.bf16.mxu0 0
    %389 = vmatpush1.bf16.msra.mxu0 0
    %390 = vmatprep.subr.bf16.mxu0 0
    %391 = vmatpush1.bf16.msra.mxu0 0
    %392 = vmatprep.subr.bf16.mxu0 0
    %393 = vmatpush1.bf16.msra.mxu0 0
    %394 = vmatprep.subr.bf16.mxu0 0
    %395 = vmatpush1.bf16.msra.mxu0 0
    %396 = vmatprep.subr.bf16.mxu0 0
    %397 = vmatpush1.bf16.msra.mxu0 0
    %398 = vmatprep.subr.bf16.mxu0 0
    %399 = vmatpush1.bf16.msra.mxu0 0
    %400 = vmatprep.subr.bf16.mxu0 0
    %401 = vmatpush1.bf16.msra.mxu0 0
    %402 = vmatprep.subr.bf16.mxu0 0
    %403 = vmatpush1.bf16.msra.mxu0 0
    %404 = vmatprep.subr.bf16.mxu0 0
    %405 = vmatpush1.bf16.msra.mxu0 0
    %406 = vmatprep.subr.bf16.mxu0 0
    %407 = vmatpush1.bf16.msra.mxu0 0
    %408 = vmatprep.subr.bf16.mxu0 0
    %409 = vmatpush1.bf16.msra.mxu0 0
    %410 = vmatprep.mubr.bf16.mxu0 0
    %411 = vmatmul.mubr.bf16.gmra.mrb[0].mxu0 %v376
    %v412 = vpop.f32.mrb[0].mxu0
    %v413 = vadd.f32 0.0, %v412
    %v414 = vpop.f32.mrb[0].mxu0
    %v415 = vpop.f32.mrb[0].mxu0
    %v416 = vpop.f32.mrb[0].mxu0
    %417 = vdwg.mxu0
    %v418 = vadd.f32 %v362, %v413
    %v419 = vxor.u32 %v418, 2147483648
    %v420 = vmul.f32 %v419, 1.442695
    %v421 = vpow.pop %v420
    %v422 = vadd.f32 %v421, 1.0
    %v423 = vrcp.pop %v422
    %v424 = vmul.f32 1.0, %v423
    %v425 = vtanh.pop %v418
    %v426 = vmul.f32 %v424, %v348
    %428 = vrot.lane.b32.xlu0 %v425, 96
    %v429 = vpop.permute.xlu0 %428
    %v431 = vmul.f32 %v424, %v429
    %433 = vrot.lane.b32.xlu0 %v431, 16
    %v434 = vpop.permute.xlu0 %433
    %v436 = vadd.f32 %v426, %v434
    %v437 = vtanh.pop %v436
    %439 = vrot.lane.b32.xlu0 %v437, 32
    %v440 = vpop.permute.xlu0 %439
    %v442 = vmul.f32 %v424, %v440
    %444 = vrot.lane.b32.xlu0 %v442, 80
    %v445 = vpop.permute.xlu0 %444
    %s447 = scalar_lea.vmem [#allocation3], 16
    %448 = vst.msk [vmem:[%s447] sm:$0xff] %vm104, %v445
    %s449 = scalar_lea.vmem [#allocation2], 24
    %v450 = vld [vmem:[%s449] sm:$0xff]
    %v451 = vpack.c.bf16 %v442, %v442
    %v452 = vld [vmem:[%s2] sm:$0xf]
    %v453 = vld [vmem:[%s2 + $0x4] sm:$0xf]
    %455 = vrot.lane.b32.xlu0 %v451, 80
    %v456 = vpop.permute.xlu0 %455
    %v459 = vunpack.c.l.b16 %v452
    %v460 = vunpack.c.l.b16 %v453
    %v461 = vpack.c.b16 %v460, %v459
    %v464 = vsel %vm104, %v456, 0
    %466 = vmatprep.subr.bf16.mxu0 0
    %467 = vmatpush1.bf16.msra.mxu0 %v461
    %468 = vmatprep.subr.bf16.mxu0 0
    %469 = vmatpush1.bf16.msra.mxu0 0
    %470 = vmatprep.subr.bf16.mxu0 0
    %471 = vmatpush1.bf16.msra.mxu0 0
    %472 = vmatprep.subr.bf16.mxu0 0
    %473 = vmatpush1.bf16.msra.mxu0 0
    %474 = vmatprep.subr.bf16.mxu0 0
    %475 = vmatpush1.bf16.msra.mxu0 0
    %476 = vmatprep.subr.bf16.mxu0 0
    %477 = vmatpush1.bf16.msra.mxu0 0
    %478 = vmatprep.subr.bf16.mxu0 0
    %479 = vmatpush1.bf16.msra.mxu0 0
    %480 = vmatprep.subr.bf16.mxu0 0
    %481 = vmatpush1.bf16.msra.mxu0 0
    %482 = vmatprep.subr.bf16.mxu0 0
    %483 = vmatpush1.bf16.msra.mxu0 0
    %484 = vmatprep.subr.bf16.mxu0 0
    %485 = vmatpush1.bf16.msra.mxu0 0
    %486 = vmatprep.subr.bf16.mxu0 0
    %487 = vmatpush1.bf16.msra.mxu0 0
    %488 = vmatprep.subr.bf16.mxu0 0
    %489 = vmatpush1.bf16.msra.mxu0 0
    %490 = vmatprep.subr.bf16.mxu0 0
    %491 = vmatpush1.bf16.msra.mxu0 0
    %492 = vmatprep.subr.bf16.mxu0 0
    %493 = vmatpush1.bf16.msra.mxu0 0
    %494 = vmatprep.subr.bf16.mxu0 0
    %495 = vmatpush1.bf16.msra.mxu0 0
    %496 = vmatprep.subr.bf16.mxu0 0
    %497 = vmatpush1.bf16.msra.mxu0 0
    %498 = vmatprep.mubr.bf16.mxu0 0
    %499 = vmatmul.mubr.bf16.gmra.mrb[0].mxu0 %v464
    %v500 = vpop.f32.mrb[0].mxu0
    %v501 = vadd.f32 0.0, %v500
    %v502 = vpop.f32.mrb[0].mxu0
    %v503 = vpop.f32.mrb[0].mxu0
    %v504 = vpop.f32.mrb[0].mxu0
    %505 = vdwg.mxu0
    %v506 = vadd.f32 %v450, %v501
    %v507 = vxor.u32 %v506, 2147483648
    %v508 = vmul.f32 %v507, 1.442695
    %v509 = vpow.pop %v508
    %v510 = vadd.f32 %v509, 1.0
    %v511 = vrcp.pop %v510
    %v512 = vmul.f32 1.0, %v511
    %v513 = vtanh.pop %v506
    %v514 = vmul.f32 %v512, %v436
    %516 = vrot.lane.b32.xlu0 %v513, 96
    %v517 = vpop.permute.xlu0 %516
    %v519 = vmul.f32 %v512, %v517
    %521 = vrot.lane.b32.xlu0 %v519, 16
    %v522 = vpop.permute.xlu0 %521
    %v524 = vadd.f32 %v514, %v522
    %v525 = vtanh.pop %v524
    %527 = vrot.lane.b32.xlu0 %v525, 32
    %v528 = vpop.permute.xlu0 %527
    %v530 = vmul.f32 %v512, %v528
    %532 = vrot.lane.b32.xlu0 %v530, 80
    %v533 = vpop.permute.xlu0 %532
    %s535 = scalar_lea.vmem [#allocation3], 24
    %536 = vst.msk [vmem:[%s535] sm:$0xff] %vm104, %v533
    %s537 = scalar_lea.vmem [#allocation2], 32
    %v538 = vld [vmem:[%s537] sm:$0xff]
    %v539 = vpack.c.bf16 %v530, %v530
    %v540 = vld [vmem:[%s2] sm:$0xf]
    %v541 = vld [vmem:[%s2 + $0x4] sm:$0xf]
    %543 = vrot.lane.b32.xlu0 %v539, 80
    %v544 = vpop.permute.xlu0 %543
    %v547 = vunpack.c.l.b16 %v540
    %v548 = vunpack.c.l.b16 %v541
    %v549 = vpack.c.b16 %v548, %v547
    %v552 = vsel %vm104, %v544, 0
    %554 = vmatprep.subr.bf16.mxu0 0
    %555 = vmatpush1.bf16.msra.mxu0 %v549
    %556 = vmatprep.subr.bf16.mxu0 0
    %557 = vmatpush1.bf16.msra.mxu0 0
    %558 = vmatprep.subr.bf16.mxu0 0
    %559 = vmatpush1.bf16.msra.mxu0 0
    %560 = vmatprep.subr.bf16.mxu0 0
    %561 = vmatpush1.bf16.msra.mxu0 0
    %562 = vmatprep.subr.bf16.mxu0 0
    %563 = vmatpush1.bf16.msra.mxu0 0
    %564 = vmatprep.subr.bf16.mxu0 0
    %565 = vmatpush1.bf16.msra.mxu0 0
    %566 = vmatprep.subr.bf16.mxu0 0
    %567 = vmatpush1.bf16.msra.mxu0 0
    %568 = vmatprep.subr.bf16.mxu0 0
    %569 = vmatpush1.bf16.msra.mxu0 0
    %570 = vmatprep.subr.bf16.mxu0 0
    %571 = vmatpush1.bf16.msra.mxu0 0
    %572 = vmatprep.subr.bf16.mxu0 0
    %573 = vmatpush1.bf16.msra.mxu0 0
    %574 = vmatprep.subr.bf16.mxu0 0
    %575 = vmatpush1.bf16.msra.mxu0 0
    %576 = vmatprep.subr.bf16.mxu0 0
    %577 = vmatpush1.bf16.msra.mxu0 0
    %578 = vmatprep.subr.bf16.mxu0 0
    %579 = vmatpush1.bf16.msra.mxu0 0
    %580 = vmatprep.subr.bf16.mxu0 0
    %581 = vmatpush1.bf16.msra.mxu0 0
    %582 = vmatprep.subr.bf16.mxu0 0
    %583 = vmatpush1.bf16.msra.mxu0 0
    %584 = vmatprep.subr.bf16.mxu0 0
    %585 = vmatpush1.bf16.msra.mxu0 0
    %586 = vmatprep.mubr.bf16.mxu0 0
    %587 = vmatmul.mubr.bf16.gmra.mrb[0].mxu0 %v552
    %v588 = vpop.f32.mrb[0].mxu0
    %v589 = vadd.f32 0.0, %v588
    %v590 = vpop.f32.mrb[0].mxu0
    %v591 = vpop.f32.mrb[0].mxu0
    %v592 = vpop.f32.mrb[0].mxu0
    %593 = vdwg.mxu0
    %v594 = vadd.f32 %v538, %v589
    %v595 = vxor.u32 %v594, 2147483648
    %v596 = vmul.f32 %v595, 1.442695
    %v597 = vpow.pop %v596
    %v598 = vadd.f32 %v597, 1.0
    %v599 = vrcp.pop %v598
    %v600 = vmul.f32 1.0, %v599
    %v601 = vtanh.pop %v594
    %v602 = vmul.f32 %v600, %v524
    %604 = vrot.lane.b32.xlu0 %v601, 96
    %v605 = vpop.permute.xlu0 %604
    %v607 = vmul.f32 %v600, %v605
    %609 = vrot.lane.b32.xlu0 %v607, 16
    %v610 = vpop.permute.xlu0 %609
    %v612 = vadd.f32 %v602, %v610
    %v613 = vtanh.pop %v612
    %615 = vrot.lane.b32.xlu0 %v613, 32
    %v616 = vpop.permute.xlu0 %615
    %v618 = vmul.f32 %v600, %v616
    %620 = vrot.lane.b32.xlu0 %v618, 80
    %v621 = vpop.permute.xlu0 %620
    %s623 = scalar_lea.vmem [#allocation3], 32
    %624 = vst.msk [vmem:[%s623] sm:$0xff] %vm104, %v621
    %s625 = scalar_lea.vmem [#allocation2], 40
    %v626 = vld [vmem:[%s625] sm:$0xff]
    %v627 = vpack.c.bf16 %v618, %v618
    %v628 = vld [vmem:[%s2] sm:$0xf]
    %v629 = vld [vmem:[%s2 + $0x4] sm:$0xf]
    %631 = vrot.lane.b32.xlu0 %v627, 80
    %v632 = vpop.permute.xlu0 %631
    %v635 = vunpack.c.l.b16 %v628
    %v636 = vunpack.c.l.b16 %v629
    %v637 = vpack.c.b16 %v636, %v635
    %v640 = vsel %vm104, %v632, 0
    %642 = vmatprep.subr.bf16.mxu0 0
    %643 = vmatpush1.bf16.msra.mxu0 %v637
    %644 = vmatprep.subr.bf16.mxu0 0
    %645 = vmatpush1.bf16.msra.mxu0 0
    %646 = vmatprep.subr.bf16.mxu0 0
    %647 = vmatpush1.bf16.msra.mxu0 0
    %648 = vmatprep.subr.bf16.mxu0 0
    %649 = vmatpush1.bf16.msra.mxu0 0
    %650 = vmatprep.subr.bf16.mxu0 0
    %651 = vmatpush1.bf16.msra.mxu0 0
    %652 = vmatprep.subr.bf16.mxu0 0
    %653 = vmatpush1.bf16.msra.mxu0 0
    %654 = vmatprep.subr.bf16.mxu0 0
    %655 = vmatpush1.bf16.msra.mxu0 0
    %656 = vmatprep.subr.bf16.mxu0 0
    %657 = vmatpush1.bf16.msra.mxu0 0
    %658 = vmatprep.subr.bf16.mxu0 0
    %659 = vmatpush1.bf16.msra.mxu0 0
    %660 = vmatprep.subr.bf16.mxu0 0
    %661 = vmatpush1.bf16.msra.mxu0 0
    %662 = vmatprep.subr.bf16.mxu0 0
    %663 = vmatpush1.bf16.msra.mxu0 0
    %664 = vmatprep.subr.bf16.mxu0 0
    %665 = vmatpush1.bf16.msra.mxu0 0
    %666 = vmatprep.subr.bf16.mxu0 0
    %667 = vmatpush1.bf16.msra.mxu0 0
    %668 = vmatprep.subr.bf16.mxu0 0
    %669 = vmatpush1.bf16.msra.mxu0 0
    %670 = vmatprep.subr.bf16.mxu0 0
    %671 = vmatpush1.bf16.msra.mxu0 0
    %672 = vmatprep.subr.bf16.mxu0 0
    %673 = vmatpush1.bf16.msra.mxu0 0
    %674 = vmatprep.mubr.bf16.mxu0 0
    %675 = vmatmul.mubr.bf16.gmra.mrb[0].mxu0 %v640
    %v676 = vpop.f32.mrb[0].mxu0
    %v677 = vadd.f32 0.0, %v676
    %v678 = vpop.f32.mrb[0].mxu0
    %v679 = vpop.f32.mrb[0].mxu0
    %v680 = vpop.f32.mrb[0].mxu0
    %681 = vdwg.mxu0
    %v682 = vadd.f32 %v626, %v677
    %v683 = vxor.u32 %v682, 2147483648
    %v684 = vmul.f32 %v683, 1.442695
    %v685 = vpow.pop %v684
    %v686 = vadd.f32 %v685, 1.0
    %v687 = vrcp.pop %v686
    %v688 = vmul.f32 1.0, %v687
    %v689 = vtanh.pop %v682
    %v690 = vmul.f32 %v688, %v612
    %692 = vrot.lane.b32.xlu0 %v689, 96
    %v693 = vpop.permute.xlu0 %692
    %v695 = vmul.f32 %v688, %v693
    %697 = vrot.lane.b32.xlu0 %v695, 16
    %v698 = vpop.permute.xlu0 %697
    %v700 = vadd.f32 %v690, %v698
    %v701 = vtanh.pop %v700
    %703 = vrot.lane.b32.xlu0 %v701, 32
    %v704 = vpop.permute.xlu0 %703
    %v706 = vmul.f32 %v688, %v704
    %708 = vrot.lane.b32.xlu0 %v706, 80
    %v709 = vpop.permute.xlu0 %708
    %s711 = scalar_lea.vmem [#allocation3], 40
    %712 = vst.msk [vmem:[%s711] sm:$0xff] %vm104, %v709
    %s713 = scalar_lea.vmem [#allocation2], 48
    %v714 = vld [vmem:[%s713] sm:$0xff]
    %v715 = vpack.c.bf16 %v706, %v706
    %v716 = vld [vmem:[%s2] sm:$0xf]
    %v717 = vld [vmem:[%s2 + $0x4] sm:$0xf]
    %719 = vrot.lane.b32.xlu0 %v715, 80
    %v720 = vpop.permute.xlu0 %719
    %v723 = vunpack.c.l.b16 %v716
    %v724 = vunpack.c.l.b16 %v717
    %v725 = vpack.c.b16 %v724, %v723
    %v728 = vsel %vm104, %v720, 0
    %730 = vmatprep.subr.bf16.mxu0 0
    %731 = vmatpush1.bf16.msra.mxu0 %v725
    %732 = vmatprep.subr.bf16.mxu0 0
    %733 = vmatpush1.bf16.msra.mxu0 0
    %734 = vmatprep.subr.bf16.mxu0 0
    %735 = vmatpush1.bf16.msra.mxu0 0
    %736 = vmatprep.subr.bf16.mxu0 0
    %737 = vmatpush1.bf16.msra.mxu0 0
    %738 = vmatprep.subr.bf16.mxu0 0
    %739 = vmatpush1.bf16.msra.mxu0 0
    %740 = vmatprep.subr.bf16.mxu0 0
    %741 = vmatpush1.bf16.msra.mxu0 0
    %742 = vmatprep.subr.bf16.mxu0 0
    %743 = vmatpush1.bf16.msra.mxu0 0
    %744 = vmatprep.subr.bf16.mxu0 0
    %745 = vmatpush1.bf16.msra.mxu0 0
    %746 = vmatprep.subr.bf16.mxu0 0
    %747 = vmatpush1.bf16.msra.mxu0 0
    %748 = vmatprep.subr.bf16.mxu0 0
    %749 = vmatpush1.bf16.msra.mxu0 0
    %750 = vmatprep.subr.bf16.mxu0 0
    %751 = vmatpush1.bf16.msra.mxu0 0
    %752 = vmatprep.subr.bf16.mxu0 0
    %753 = vmatpush1.bf16.msra.mxu0 0
    %754 = vmatprep.subr.bf16.mxu0 0
    %755 = vmatpush1.bf16.msra.mxu0 0
    %756 = vmatprep.subr.bf16.mxu0 0
    %757 = vmatpush1.bf16.msra.mxu0 0
    %758 = vmatprep.subr.bf16.mxu0 0
    %759 = vmatpush1.bf16.msra.mxu0 0
    %760 = vmatprep.subr.bf16.mxu0 0
    %761 = vmatpush1.bf16.msra.mxu0 0
    %762 = vmatprep.mubr.bf16.mxu0 0
    %763 = vmatmul.mubr.bf16.gmra.mrb[0].mxu0 %v728
    %v764 = vpop.f32.mrb[0].mxu0
    %v765 = vadd.f32 0.0, %v764
    %v766 = vpop.f32.mrb[0].mxu0
    %v767 = vpop.f32.mrb[0].mxu0
    %v768 = vpop.f32.mrb[0].mxu0
    %769 = vdwg.mxu0
    %v770 = vadd.f32 %v714, %v765
    %v771 = vxor.u32 %v770, 2147483648
    %v772 = vmul.f32 %v771, 1.442695
    %v773 = vpow.pop %v772
    %v774 = vadd.f32 %v773, 1.0
    %v775 = vrcp.pop %v774
    %v776 = vmul.f32 1.0, %v775
    %v777 = vtanh.pop %v770
    %v778 = vmul.f32 %v776, %v700
    %780 = vrot.lane.b32.xlu0 %v777, 96
    %v781 = vpop.permute.xlu0 %780
    %v783 = vmul.f32 %v776, %v781
    %785 = vrot.lane.b32.xlu0 %v783, 16
    %v786 = vpop.permute.xlu0 %785
    %v788 = vadd.f32 %v778, %v786
    %v789 = vtanh.pop %v788
    %791 = vrot.lane.b32.xlu0 %v789, 32
    %v792 = vpop.permute.xlu0 %791
    %v794 = vmul.f32 %v776, %v792
    %796 = vrot.lane.b32.xlu0 %v794, 80
    %v797 = vpop.permute.xlu0 %796
    %s799 = scalar_lea.vmem [#allocation3], 48
    %800 = vst.msk [vmem:[%s799] sm:$0xff] %vm104, %v797
    %s801 = scalar_lea.vmem [#allocation2], 56
    %v802 = vld [vmem:[%s801] sm:$0xff]
    %v803 = vpack.c.bf16 %v794, %v794
    %v804 = vld [vmem:[%s2] sm:$0xf]
    %v805 = vld [vmem:[%s2 + $0x4] sm:$0xf]
    %807 = vrot.lane.b32.xlu0 %v803, 80
    %v808 = vpop.permute.xlu0 %807
    %v811 = vunpack.c.l.b16 %v804
    %v812 = vunpack.c.l.b16 %v805
    %v813 = vpack.c.b16 %v812, %v811
    %v816 = vsel %vm104, %v808, 0
    %818 = vmatprep.subr.bf16.mxu0 0
    %819 = vmatpush1.bf16.msra.mxu0 %v813
    %820 = vmatprep.subr.bf16.mxu0 0
    %821 = vmatpush1.bf16.msra.mxu0 0
    %822 = vmatprep.subr.bf16.mxu0 0
    %823 = vmatpush1.bf16.msra.mxu0 0
    %824 = vmatprep.subr.bf16.mxu0 0
    %825 = vmatpush1.bf16.msra.mxu0 0
    %826 = vmatprep.subr.bf16.mxu0 0
    %827 = vmatpush1.bf16.msra.mxu0 0
    %828 = vmatprep.subr.bf16.mxu0 0
    %829 = vmatpush1.bf16.msra.mxu0 0
    %830 = vmatprep.subr.bf16.mxu0 0
    %831 = vmatpush1.bf16.msra.mxu0 0
    %832 = vmatprep.subr.bf16.mxu0 0
    %833 = vmatpush1.bf16.msra.mxu0 0
    %834 = vmatprep.subr.bf16.mxu0 0
    %835 = vmatpush1.bf16.msra.mxu0 0
    %836 = vmatprep.subr.bf16.mxu0 0
    %837 = vmatpush1.bf16.msra.mxu0 0
    %838 = vmatprep.subr.bf16.mxu0 0
    %839 = vmatpush1.bf16.msra.mxu0 0
    %840 = vmatprep.subr.bf16.mxu0 0
    %841 = vmatpush1.bf16.msra.mxu0 0
    %842 = vmatprep.subr.bf16.mxu0 0
    %843 = vmatpush1.bf16.msra.mxu0 0
    %844 = vmatprep.subr.bf16.mxu0 0
    %845 = vmatpush1.bf16.msra.mxu0 0
    %846 = vmatprep.subr.bf16.mxu0 0
    %847 = vmatpush1.bf16.msra.mxu0 0
    %848 = vmatprep.subr.bf16.mxu0 0
    %849 = vmatpush1.bf16.msra.mxu0 0
    %850 = vmatprep.mubr.bf16.mxu0 0
    %851 = vmatmul.mubr.bf16.gmra.mrb[0].mxu0 %v816
    %v852 = vpop.f32.mrb[0].mxu0
    %v853 = vadd.f32 0.0, %v852
    %v854 = vpop.f32.mrb[0].mxu0
    %v855 = vpop.f32.mrb[0].mxu0
    %v856 = vpop.f32.mrb[0].mxu0
    %857 = vdwg.mxu0
    %v858 = vadd.f32 %v802, %v853
    %v859 = vxor.u32 %v858, 2147483648
    %v860 = vmul.f32 %v859, 1.442695
    %v861 = vpow.pop %v860
    %v862 = vadd.f32 %v861, 1.0
    %v863 = vrcp.pop %v862
    %v864 = vmul.f32 1.0, %v863
    %v865 = vtanh.pop %v858
    %v866 = vmul.f32 %v864, %v788
    %868 = vrot.lane.b32.xlu0 %v865, 96
    %v869 = vpop.permute.xlu0 %868
    %v871 = vmul.f32 %v864, %v869
    %873 = vrot.lane.b32.xlu0 %v871, 16
    %v874 = vpop.permute.xlu0 %873
    %v876 = vadd.f32 %v866, %v874
    %v877 = vtanh.pop %v876
    %879 = vrot.lane.b32.xlu0 %v877, 32
    %v880 = vpop.permute.xlu0 %879
    %v882 = vmul.f32 %v864, %v880
    %884 = vrot.lane.b32.xlu0 %v882, 80
    %v885 = vpop.permute.xlu0 %884
    %s887 = scalar_lea.vmem [#allocation3], 56
    %888 = vst.msk [vmem:[%s887] sm:$0xff] %vm104, %v885
    %v889 = vld [vmem:[#allocation3] sm:$0xff]
    %v890 = vld [vmem:[#allocation3 + $0x8] sm:$0xff]
    %v891 = vld [vmem:[#allocation3 + $0x10] sm:$0xff]
    %v892 = vld [vmem:[#allocation3 + $0x18] sm:$0xff]
    %v893 = vld [vmem:[#allocation3 + $0x20] sm:$0xff]
    %v894 = vld [vmem:[#allocation3 + $0x28] sm:$0xff]
    %v895 = vld [vmem:[#allocation3 + $0x30] sm:$0xff]
    %v896 = vld [vmem:[#allocation3 + $0x38] sm:$0xff]
    %v897 = vpack.c.bf16 %v890, %v889
    %v898 = vpack.c.bf16 %v892, %v891
    %v899 = vpack.c.bf16 %v894, %v893
    %v900 = vpack.c.bf16 %v896, %v895
    %v901 = vld [vmem:[%s4] sm:$0xf]
    %v902 = vld [vmem:[%s4 + $0x4] sm:$0xf]
    %v903 = vld [vmem:[%s6] sm:$0x1]
    %v905 = vlaneseq
    %v906 = vshrl.u32 %v905, 7
    %v907 = vsub.s32 0, %v906
    %v908 = vrot.slane %v903, %v907
    %v912 = vunpack.c.l.b16 %v901
    %v913 = vunpack.c.l.b16 %v902
    %v914 = vpack.c.b16 %v913, %v912
    %v917 = vsel %vm104, %v897, 0
    %v920 = vsel %vm104, %v898, 0
    %v923 = vsel %vm104, %v899, 0
    %v926 = vsel %vm104, %v900, 0
    %928 = vmatprep.subr.bf16.mxu0 0
    %929 = vmatpush1.bf16.msra.mxu0 %v914
    %930 = vmatprep.subr.bf16.mxu0 0
    %931 = vmatpush1.bf16.msra.mxu0 0
    %932 = vmatprep.subr.bf16.mxu0 0
    %933 = vmatpush1.bf16.msra.mxu0 0
    %934 = vmatprep.subr.bf16.mxu0 0
    %935 = vmatpush1.bf16.msra.mxu0 0
    %936 = vmatprep.subr.bf16.mxu0 0
    %937 = vmatpush1.bf16.msra.mxu0 0
    %938 = vmatprep.subr.bf16.mxu0 0
    %939 = vmatpush1.bf16.msra.mxu0 0
    %940 = vmatprep.subr.bf16.mxu0 0
    %941 = vmatpush1.bf16.msra.mxu0 0
    %942 = vmatprep.subr.bf16.mxu0 0
    %943 = vmatpush1.bf16.msra.mxu0 0
    %944 = vmatprep.subr.bf16.mxu0 0
    %945 = vmatpush1.bf16.msra.mxu0 0
    %946 = vmatprep.subr.bf16.mxu0 0
    %947 = vmatpush1.bf16.msra.mxu0 0
    %948 = vmatprep.subr.bf16.mxu0 0
    %949 = vmatpush1.bf16.msra.mxu0 0
    %950 = vmatprep.subr.bf16.mxu0 0
    %951 = vmatpush1.bf16.msra.mxu0 0
    %952 = vmatprep.subr.bf16.mxu0 0
    %953 = vmatpush1.bf16.msra.mxu0 0
    %954 = vmatprep.subr.bf16.mxu0 0
    %955 = vmatpush1.bf16.msra.mxu0 0
    %956 = vmatprep.subr.bf16.mxu0 0
    %957 = vmatpush1.bf16.msra.mxu0 0
    %958 = vmatprep.subr.bf16.mxu0 0
    %959 = vmatpush1.bf16.msra.mxu0 0
    %960 = vmatprep.mubr.bf16.mxu0 0
    %961 = vmatmul.mubr.bf16.gmra.mrb[0].mxu0 %v917
    %v962 = vpop.f32.mrb[0].mxu0
    %v963 = vadd.f32 %v908, %v962
    %v964 = vpop.f32.mrb[0].mxu0
    %v965 = vpop.f32.mrb[0].mxu0
    %v966 = vadd.f32 %v908, %v965
    %v967 = vpop.f32.mrb[0].mxu0
    %968 = vmatprep.mubr.bf16.mxu0 0
    %969 = vmatmul.mubr.bf16.gmra.mrb[0].mxu0 %v920
    %v970 = vpop.f32.mrb[0].mxu0
    %v971 = vadd.f32 %v908, %v970
    %v972 = vpop.f32.mrb[0].mxu0
    %v973 = vpop.f32.mrb[0].mxu0
    %v974 = vadd.f32 %v908, %v973
    %v975 = vpop.f32.mrb[0].mxu0
    %976 = vmatprep.mubr.bf16.mxu0 0
    %977 = vmatmul.mubr.bf16.gmra.mrb[0].mxu0 %v923
    %v978 = vpop.f32.mrb[0].mxu0
    %v979 = vadd.f32 %v908, %v978
    %v980 = vpop.f32.mrb[0].mxu0
    %v981 = vpop.f32.mrb[0].mxu0
    %v982 = vadd.f32 %v908, %v981
    %v983 = vpop.f32.mrb[0].mxu0
    %984 = vmatprep.mubr.bf16.mxu0 0
    %985 = vmatmul.mubr.bf16.gmra.mrb[0].mxu0 %v926
    %v986 = vpop.f32.mrb[0].mxu0
    %v987 = vadd.f32 %v908, %v986
    %v988 = vpop.f32.mrb[0].mxu0
    %v989 = vpop.f32.mrb[0].mxu0
    %v990 = vadd.f32 %v908, %v989
    %v991 = vpop.f32.mrb[0].mxu0
    %992 = vdwg.mxu0
    %993 = vst.msk [vmem:[#allocation2] sm:$0xff] %vm182, %v963
    %994 = vst.msk [vmem:[#allocation2 + $0x8] sm:$0xff] %vm182, %v966
    %995 = vst.msk [vmem:[#allocation2 + $0x10] sm:$0xff] %vm182, %v971
    %996 = vst.msk [vmem:[#allocation2 + $0x18] sm:$0xff] %vm182, %v974
    %997 = vst.msk [vmem:[#allocation2 + $0x20] sm:$0xff] %vm182, %v979
    %998 = vst.msk [vmem:[#allocation2 + $0x28] sm:$0xff] %vm182, %v982
    %999 = vst.msk [vmem:[#allocation2 + $0x30] sm:$0xff] %vm182, %v987
    %1000 = vst.msk [vmem:[#allocation2 + $0x38] sm:$0xff] %vm182, %v990
    %v1001 = vld [vmem:[#allocation2] sm:$0xff]
    %v1002 = vld [vmem:[#allocation6] sm:$0xf]
    %v1003 = vld [vmem:[#allocation6 + $0x4] sm:$0xf]
    %v1006 = vunpack.c.l.b16 %v1002
    %v1007 = vunpack.c.l.b16 %v1003
    %v1008 = vpack.c.b16 %v1007, %v1006
    %1010 = vmatprep.subr.bf16.mxu0 0
    %1011 = vmatpush1.bf16.msra.mxu0 %v1008
    %1012 = vmatprep.subr.bf16.mxu0 0
    %1013 = vmatpush1.bf16.msra.mxu0 0
    %1014 = vmatprep.subr.bf16.mxu0 0
    %1015 = vmatpush1.bf16.msra.mxu0 0
    %1016 = vmatprep.subr.bf16.mxu0 0
    %1017 = vmatpush1.bf16.msra.mxu0 0
    %1018 = vmatprep.subr.bf16.mxu0 0
    %1019 = vmatpush1.bf16.msra.mxu0 0
    %1020 = vmatprep.subr.bf16.mxu0 0
    %1021 = vmatpush1.bf16.msra.mxu0 0
    %1022 = vmatprep.subr.bf16.mxu0 0
    %1023 = vmatpush1.bf16.msra.mxu0 0
    %1024 = vmatprep.subr.bf16.mxu0 0
    %1025 = vmatpush1.bf16.msra.mxu0 0
    %1026 = vmatprep.subr.bf16.mxu0 0
    %1027 = vmatpush1.bf16.msra.mxu0 0
    %1028 = vmatprep.subr.bf16.mxu0 0
    %1029 = vmatpush1.bf16.msra.mxu0 0
    %1030 = vmatprep.subr.bf16.mxu0 0
    %1031 = vmatpush1.bf16.msra.mxu0 0
    %1032 = vmatprep.subr.bf16.mxu0 0
    %1033 = vmatpush1.bf16.msra.mxu0 0
    %1034 = vmatprep.subr.bf16.mxu0 0
    %1035 = vmatpush1.bf16.msra.mxu0 0
    %1036 = vmatprep.subr.bf16.mxu0 0
    %1037 = vmatpush1.bf16.msra.mxu0 0
    %1038 = vmatprep.subr.bf16.mxu0 0
    %1039 = vmatpush1.bf16.msra.mxu0 0
    %1040 = vmatprep.subr.bf16.mxu0 0
    %1041 = vmatpush1.bf16.msra.mxu0 0
    %1042 = vmatprep.mubr.bf16.mxu0 0
    %1043 = vmatmul.mubr.bf16.gmra.mrb[0].mxu0 %v201
    %v1044 = vpop.f32.mrb[0].mxu0
    %v1045 = vadd.f32 0.0, %v1044
    %v1046 = vpop.f32.mrb[0].mxu0
    %v1047 = vpop.f32.mrb[0].mxu0
    %v1048 = vpop.f32.mrb[0].mxu0
    %1049 = vdwg.mxu0
    %v1050 = vadd.f32 %v1001, %v1045
    %v1051 = vxor.u32 %v1050, 2147483648
    %v1052 = vmul.f32 %v1051, 1.442695
    %v1053 = vpow.pop %v1052
    %v1054 = vadd.f32 %v1053, 1.0
    %v1055 = vrcp.pop %v1054
    %v1056 = vmul.f32 1.0, %v1055
    %v1057 = vtanh.pop %v1050
    %v1058 = vmul.f32 %v1056, 0.0
    %1060 = vrot.lane.b32.xlu0 %v1057, 96
    %v1061 = vpop.permute.xlu0 %1060
    %v1063 = vmul.f32 %v1056, %v1061
    %1065 = vrot.lane.b32.xlu0 %v1063, 16
    %v1066 = vpop.permute.xlu0 %1065
    %v1068 = vadd.f32 %v1058, %v1066
    %v1069 = vtanh.pop %v1068
    %1071 = vrot.lane.b32.xlu0 %v1069, 32
    %v1072 = vpop.permute.xlu0 %1071
    %v1074 = vmul.f32 %v1056, %v1072
    %1076 = vrot.lane.b32.xlu0 %v1074, 80
    %v1077 = vpop.permute.xlu0 %1076
    %1079 = vst.msk [vmem:[#allocation3] sm:$0xff] %vm104, %v1077
    %v1080 = vld [vmem:[%s273] sm:$0xff]
    %v1081 = vpack.c.bf16 %v1074, %v1074
    %v1082 = vld [vmem:[#allocation6] sm:$0xf]
    %v1083 = vld [vmem:[#allocation6 + $0x4] sm:$0xf]
    %1085 = vrot.lane.b32.xlu0 %v1081, 80
    %v1086 = vpop.permute.xlu0 %1085
    %v1089 = vunpack.c.l.b16 %v1082
    %v1090 = vunpack.c.l.b16 %v1083
    %v1091 = vpack.c.b16 %v1090, %v1089
    %v1094 = vsel %vm104, %v1086, 0
    %1096 = vmatprep.subr.bf16.mxu0 0
    %1097 = vmatpush1.bf16.msra.mxu0 %v1091
    %1098 = vmatprep.subr.bf16.mxu0 0
    %1099 = vmatpush1.bf16.msra.mxu0 0
    %1100 = vmatprep.subr.bf16.mxu0 0
    %1101 = vmatpush1.bf16.msra.mxu0 0
    %1102 = vmatprep.subr.bf16.mxu0 0
    %1103 = vmatpush1.bf16.msra.mxu0 0
    %1104 = vmatprep.subr.bf16.mxu0 0
    %1105 = vmatpush1.bf16.msra.mxu0 0
    %1106 = vmatprep.subr.bf16.mxu0 0
    %1107 = vmatpush1.bf16.msra.mxu0 0
    %1108 = vmatprep.subr.bf16.mxu0 0
    %1109 = vmatpush1.bf16.msra.mxu0 0
    %1110 = vmatprep.subr.bf16.mxu0 0
    %1111 = vmatpush1.bf16.msra.mxu0 0
    %1112 = vmatprep.subr.bf16.mxu0 0
    %1113 = vmatpush1.bf16.msra.mxu0 0
    %1114 = vmatprep.subr.bf16.mxu0 0
    %1115 = vmatpush1.bf16.msra.mxu0 0
    %1116 = vmatprep.subr.bf16.mxu0 0
    %1117 = vmatpush1.bf16.msra.mxu0 0
    %1118 = vmatprep.subr.bf16.mxu0 0
    %1119 = vmatpush1.bf16.msra.mxu0 0
    %1120 = vmatprep.subr.bf16.mxu0 0
    %1121 = vmatpush1.bf16.msra.mxu0 0
    %1122 = vmatprep.subr.bf16.mxu0 0
    %1123 = vmatpush1.bf16.msra.mxu0 0
    %1124 = vmatprep.subr.bf16.mxu0 0
    %1125 = vmatpush1.bf16.msra.mxu0 0
    %1126 = vmatprep.subr.bf16.mxu0 0
    %1127 = vmatpush1.bf16.msra.mxu0 0
    %1128 = vmatprep.mubr.bf16.mxu0 0
    %1129 = vmatmul.mubr.bf16.gmra.mrb[0].mxu0 %v1094
    %v1130 = vpop.f32.mrb[0].mxu0
    %v1131 = vadd.f32 0.0, %v1130
    %v1132 = vpop.f32.mrb[0].mxu0
    %v1133 = vpop.f32.mrb[0].mxu0
    %v1134 = vpop.f32.mrb[0].mxu0
    %1135 = vdwg.mxu0
    %v1136 = vadd.f32 %v1080, %v1131
    %v1137 = vxor.u32 %v1136, 2147483648
    %v1138 = vmul.f32 %v1137, 1.442695
    %v1139 = vpow.pop %v1138
    %v1140 = vadd.f32 %v1139, 1.0
    %v1141 = vrcp.pop %v1140
    %v1142 = vmul.f32 1.0, %v1141
    %v1143 = vtanh.pop %v1136
    %v1144 = vmul.f32 %v1142, %v1068
    %1146 = vrot.lane.b32.xlu0 %v1143, 96
    %v1147 = vpop.permute.xlu0 %1146
    %v1149 = vmul.f32 %v1142, %v1147
    %1151 = vrot.lane.b32.xlu0 %v1149, 16
    %v1152 = vpop.permute.xlu0 %1151
    %v1154 = vadd.f32 %v1144, %v1152
    %v1155 = vtanh.pop %v1154
    %1157 = vrot.lane.b32.xlu0 %v1155, 32
    %v1158 = vpop.permute.xlu0 %1157
    %v1160 = vmul.f32 %v1142, %v1158
    %1162 = vrot.lane.b32.xlu0 %v1160, 80
    %v1163 = vpop.permute.xlu0 %1162
    %1165 = vst.msk [vmem:[%s359] sm:$0xff] %vm104, %v1163
    %v1166 = vld [vmem:[%s361] sm:$0xff]
    %v1167 = vpack.c.bf16 %v1160, %v1160
    %v1168 = vld [vmem:[#allocation6] sm:$0xf]
    %v1169 = vld [vmem:[#allocation6 + $0x4] sm:$0xf]
    %1171 = vrot.lane.b32.xlu0 %v1167, 80
    %v1172 = vpop.permute.xlu0 %1171
    %v1175 = vunpack.c.l.b16 %v1168
    %v1176 = vunpack.c.l.b16 %v1169
    %v1177 = vpack.c.b16 %v1176, %v1175
    %v1180 = vsel %vm104, %v1172, 0
    %1182 = vmatprep.subr.bf16.mxu0 0
    %1183 = vmatpush1.bf16.msra.mxu0 %v1177
    %1184 = vmatprep.subr.bf16.mxu0 0
    %1185 = vmatpush1.bf16.msra.mxu0 0
    %1186 = vmatprep.subr.bf16.mxu0 0
    %1187 = vmatpush1.bf16.msra.mxu0 0
    %1188 = vmatprep.subr.bf16.mxu0 0
    %1189 = vmatpush1.bf16.msra.mxu0 0
    %1190 = vmatprep.subr.bf16.mxu0 0
    %1191 = vmatpush1.bf16.msra.mxu0 0
    %1192 = vmatprep.subr.bf16.mxu0 0
    %1193 = vmatpush1.bf16.msra.mxu0 0
    %1194 = vmatprep.subr.bf16.mxu0 0
    %1195 = vmatpush1.bf16.msra.mxu0 0
    %1196 = vmatprep.subr.bf16.mxu0 0
    %1197 = vmatpush1.bf16.msra.mxu0 0
    %1198 = vmatprep.subr.bf16.mxu0 0
    %1199 = vmatpush1.bf16.msra.mxu0 0
    %1200 = vmatprep.subr.bf16.mxu0 0
    %1201 = vmatpush1.bf16.msra.mxu0 0
    %1202 = vmatprep.subr.bf16.mxu0 0
    %1203 = vmatpush1.bf16.msra.mxu0 0
    %1204 = vmatprep.subr.bf16.mxu0 0
    %1205 = vmatpush1.bf16.msra.mxu0 0
    %1206 = vmatprep.subr.bf16.mxu0 0
    %1207 = vmatpush1.bf16.msra.mxu0 0
    %1208 = vmatprep.subr.bf16.mxu0 0
    %1209 = vmatpush1.bf16.msra.mxu0 0
    %1210 = vmatprep.subr.bf16.mxu0 0
    %1211 = vmatpush1.bf16.msra.mxu0 0
    %1212 = vmatprep.subr.bf16.mxu0 0
    %1213 = vmatpush1.bf16.msra.mxu0 0
    %1214 = vmatprep.mubr.bf16.mxu0 0
    %1215 = vmatmul.mubr.bf16.gmra.mrb[0].mxu0 %v1180
    %v1216 = vpop.f32.mrb[0].mxu0
    %v1217 = vadd.f32 0.0, %v1216
    %v1218 = vpop.f32.mrb[0].mxu0
    %v1219 = vpop.f32.mrb[0].mxu0
    %v1220 = vpop.f32.mrb[0].mxu0
    %1221 = vdwg.mxu0
    %v1222 = vadd.f32 %v1166, %v1217
    %v1223 = vxor.u32 %v1222, 2147483648
    %v1224 = vmul.f32 %v1223, 1.442695
    %v1225 = vpow.pop %v1224
    %v1226 = vadd.f32 %v1225, 1.0
    %v1227 = vrcp.pop %v1226
    %v1228 = vmul.f32 1.0, %v1227
    %v1229 = vtanh.pop %v1222
    %v1230 = vmul.f32 %v1228, %v1154
    %1232 = vrot.lane.b32.xlu0 %v1229, 96
    %v1233 = vpop.permute.xlu0 %1232
    %v1235 = vmul.f32 %v1228, %v1233
    %1237 = vrot.lane.b32.xlu0 %v1235, 16
    %v1238 = vpop.permute.xlu0 %1237
    %v1240 = vadd.f32 %v1230, %v1238
    %v1241 = vtanh.pop %v1240
    %1243 = vrot.lane.b32.xlu0 %v1241, 32
    %v1244 = vpop.permute.xlu0 %1243
    %v1246 = vmul.f32 %v1228, %v1244
    %1248 = vrot.lane.b32.xlu0 %v1246, 80
    %v1249 = vpop.permute.xlu0 %1248
    %1251 = vst.msk [vmem:[%s447] sm:$0xff] %vm104, %v1249
    %v1252 = vld [vmem:[%s449] sm:$0xff]
    %v1253 = vpack.c.bf16 %v1246, %v1246
    %v1254 = vld [vmem:[#allocation6] sm:$0xf]
    %v1255 = vld [vmem:[#allocation6 + $0x4] sm:$0xf]
    %1257 = vrot.lane.b32.xlu0 %v1253, 80
    %v1258 = vpop.permute.xlu0 %1257
    %v1261 = vunpack.c.l.b16 %v1254
    %v1262 = vunpack.c.l.b16 %v1255
    %v1263 = vpack.c.b16 %v1262, %v1261
    %v1266 = vsel %vm104, %v1258, 0
    %1268 = vmatprep.subr.bf16.mxu0 0
    %1269 = vmatpush1.bf16.msra.mxu0 %v1263
    %1270 = vmatprep.subr.bf16.mxu0 0
    %1271 = vmatpush1.bf16.msra.mxu0 0
    %1272 = vmatprep.subr.bf16.mxu0 0
    %1273 = vmatpush1.bf16.msra.mxu0 0
    %1274 = vmatprep.subr.bf16.mxu0 0
    %1275 = vmatpush1.bf16.msra.mxu0 0
    %1276 = vmatprep.subr.bf16.mxu0 0
    %1277 = vmatpush1.bf16.msra.mxu0 0
    %1278 = vmatprep.subr.bf16.mxu0 0
    %1279 = vmatpush1.bf16.msra.mxu0 0
    %1280 = vmatprep.subr.bf16.mxu0 0
    %1281 = vmatpush1.bf16.msra.mxu0 0
    %1282 = vmatprep.subr.bf16.mxu0 0
    %1283 = vmatpush1.bf16.msra.mxu0 0
    %1284 = vmatprep.subr.bf16.mxu0 0
    %1285 = vmatpush1.bf16.msra.mxu0 0
    %1286 = vmatprep.subr.bf16.mxu0 0
    %1287 = vmatpush1.bf16.msra.mxu0 0
    %1288 = vmatprep.subr.bf16.mxu0 0
    %1289 = vmatpush1.bf16.msra.mxu0 0
    %1290 = vmatprep.subr.bf16.mxu0 0
    %1291 = vmatpush1.bf16.msra.mxu0 0
    %1292 = vmatprep.subr.bf16.mxu0 0
    %1293 = vmatpush1.bf16.msra.mxu0 0
    %1294 = vmatprep.subr.bf16.mxu0 0
    %1295 = vmatpush1.bf16.msra.mxu0 0
    %1296 = vmatprep.subr.bf16.mxu0 0
    %1297 = vmatpush1.bf16.msra.mxu0 0
    %1298 = vmatprep.subr.bf16.mxu0 0
    %1299 = vmatpush1.bf16.msra.mxu0 0
    %1300 = vmatprep.mubr.bf16.mxu0 0
    %1301 = vmatmul.mubr.bf16.gmra.mrb[0].mxu0 %v1266
    %v1302 = vpop.f32.mrb[0].mxu0
    %v1303 = vadd.f32 0.0, %v1302
    %v1304 = vpop.f32.mrb[0].mxu0
    %v1305 = vpop.f32.mrb[0].mxu0
    %v1306 = vpop.f32.mrb[0].mxu0
    %1307 = vdwg.mxu0
    %v1308 = vadd.f32 %v1252, %v1303
    %v1309 = vxor.u32 %v1308, 2147483648
    %v1310 = vmul.f32 %v1309, 1.442695
    %v1311 = vpow.pop %v1310
    %v1312 = vadd.f32 %v1311, 1.0
    %v1313 = vrcp.pop %v1312
    %v1314 = vmul.f32 1.0, %v1313
    %v1315 = vtanh.pop %v1308
    %v1316 = vmul.f32 %v1314, %v1240
    %1318 = vrot.lane.b32.xlu0 %v1315, 96
    %v1319 = vpop.permute.xlu0 %1318
    %v1321 = vmul.f32 %v1314, %v1319
    %1323 = vrot.lane.b32.xlu0 %v1321, 16
    %v1324 = vpop.permute.xlu0 %1323
    %v1326 = vadd.f32 %v1316, %v1324
    %v1327 = vtanh.pop %v1326
    %1329 = vrot.lane.b32.xlu0 %v1327, 32
    %v1330 = vpop.permute.xlu0 %1329
    %v1332 = vmul.f32 %v1314, %v1330
    %1334 = vrot.lane.b32.xlu0 %v1332, 80
    %v1335 = vpop.permute.xlu0 %1334
    %1337 = vst.msk [vmem:[%s535] sm:$0xff] %vm104, %v1335
    %v1338 = vld [vmem:[%s537] sm:$0xff]
    %v1339 = vpack.c.bf16 %v1332, %v1332
    %v1340 = vld [vmem:[#allocation6] sm:$0xf]
    %v1341 = vld [vmem:[#allocation6 + $0x4] sm:$0xf]
    %1343 = vrot.lane.b32.xlu0 %v1339, 80
    %v1344 = vpop.permute.xlu0 %1343
    %v1347 = vunpack.c.l.b16 %v1340
    %v1348 = vunpack.c.l.b16 %v1341
    %v1349 = vpack.c.b16 %v1348, %v1347
    %v1352 = vsel %vm104, %v1344, 0
    %1354 = vmatprep.subr.bf16.mxu0 0
    %1355 = vmatpush1.bf16.msra.mxu0 %v1349
    %1356 = vmatprep.subr.bf16.mxu0 0
    %1357 = vmatpush1.bf16.msra.mxu0 0
    %1358 = vmatprep.subr.bf16.mxu0 0
    %1359 = vmatpush1.bf16.msra.mxu0 0
    %1360 = vmatprep.subr.bf16.mxu0 0
    %1361 = vmatpush1.bf16.msra.mxu0 0
    %1362 = vmatprep.subr.bf16.mxu0 0
    %1363 = vmatpush1.bf16.msra.mxu0 0
    %1364 = vmatprep.subr.bf16.mxu0 0
    %1365 = vmatpush1.bf16.msra.mxu0 0
    %1366 = vmatprep.subr.bf16.mxu0 0
    %1367 = vmatpush1.bf16.msra.mxu0 0
    %1368 = vmatprep.subr.bf16.mxu0 0
    %1369 = vmatpush1.bf16.msra.mxu0 0
    %1370 = vmatprep.subr.bf16.mxu0 0
    %1371 = vmatpush1.bf16.msra.mxu0 0
    %1372 = vmatprep.subr.bf16.mxu0 0
    %1373 = vmatpush1.bf16.msra.mxu0 0
    %1374 = vmatprep.subr.bf16.mxu0 0
    %1375 = vmatpush1.bf16.msra.mxu0 0
    %1376 = vmatprep.subr.bf16.mxu0 0
    %1377 = vmatpush1.bf16.msra.mxu0 0
    %1378 = vmatprep.subr.bf16.mxu0 0
    %1379 = vmatpush1.bf16.msra.mxu0 0
    %1380 = vmatprep.subr.bf16.mxu0 0
    %1381 = vmatpush1.bf16.msra.mxu0 0
    %1382 = vmatprep.subr.bf16.mxu0 0
    %1383 = vmatpush1.bf16.msra.mxu0 0
    %1384 = vmatprep.subr.bf16.mxu0 0
    %1385 = vmatpush1.bf16.msra.mxu0 0
    %1386 = vmatprep.mubr.bf16.mxu0 0
    %1387 = vmatmul.mubr.bf16.gmra.mrb[0].mxu0 %v1352
    %v1388 = vpop.f32.mrb[0].mxu0
    %v1389 = vadd.f32 0.0, %v1388
    %v1390 = vpop.f32.mrb[0].mxu0
    %v1391 = vpop.f32.mrb[0].mxu0
    %v1392 = vpop.f32.mrb[0].mxu0
    %1393 = vdwg.mxu0
    %v1394 = vadd.f32 %v1338, %v1389
    %v1395 = vxor.u32 %v1394, 2147483648
    %v1396 = vmul.f32 %v1395, 1.442695
    %v1397 = vpow.pop %v1396
    %v1398 = vadd.f32 %v1397, 1.0
    %v1399 = vrcp.pop %v1398
    %v1400 = vmul.f32 1.0, %v1399
    %v1401 = vtanh.pop %v1394
    %v1402 = vmul.f32 %v1400, %v1326
    %1404 = vrot.lane.b32.xlu0 %v1401, 96
    %v1405 = vpop.permute.xlu0 %1404
    %v1407 = vmul.f32 %v1400, %v1405
    %1409 = vrot.lane.b32.xlu0 %v1407, 16
    %v1410 = vpop.permute.xlu0 %1409
    %v1412 = vadd.f32 %v1402, %v1410
    %v1413 = vtanh.pop %v1412
    %1415 = vrot.lane.b32.xlu0 %v1413, 32
    %v1416 = vpop.permute.xlu0 %1415
    %v1418 = vmul.f32 %v1400, %v1416
    %1420 = vrot.lane.b32.xlu0 %v1418, 80
    %v1421 = vpop.permute.xlu0 %1420
    %1423 = vst.msk [vmem:[%s623] sm:$0xff] %vm104, %v1421
    %v1424 = vld [vmem:[%s625] sm:$0xff]
    %v1425 = vpack.c.bf16 %v1418, %v1418
    %v1426 = vld [vmem:[#allocation6] sm:$0xf]
    %v1427 = vld [vmem:[#allocation6 + $0x4] sm:$0xf]
    %1429 = vrot.lane.b32.xlu0 %v1425, 80
    %v1430 = vpop.permute.xlu0 %1429
    %v1433 = vunpack.c.l.b16 %v1426
    %v1434 = vunpack.c.l.b16 %v1427
    %v1435 = vpack.c.b16 %v1434, %v1433
    %v1438 = vsel %vm104, %v1430, 0
    %1440 = vmatprep.subr.bf16.mxu0 0
    %1441 = vmatpush1.bf16.msra.mxu0 %v1435
    %1442 = vmatprep.subr.bf16.mxu0 0
    %1443 = vmatpush1.bf16.msra.mxu0 0
    %1444 = vmatprep.subr.bf16.mxu0 0
    %1445 = vmatpush1.bf16.msra.mxu0 0
    %1446 = vmatprep.subr.bf16.mxu0 0
    %1447 = vmatpush1.bf16.msra.mxu0 0
    %1448 = vmatprep.subr.bf16.mxu0 0
    %1449 = vmatpush1.bf16.msra.mxu0 0
    %1450 = vmatprep.subr.bf16.mxu0 0
    %1451 = vmatpush1.bf16.msra.mxu0 0
    %1452 = vmatprep.subr.bf16.mxu0 0
    %1453 = vmatpush1.bf16.msra.mxu0 0
    %1454 = vmatprep.subr.bf16.mxu0 0
    %1455 = vmatpush1.bf16.msra.mxu0 0
    %1456 = vmatprep.subr.bf16.mxu0 0
    %1457 = vmatpush1.bf16.msra.mxu0 0
    %1458 = vmatprep.subr.bf16.mxu0 0
    %1459 = vmatpush1.bf16.msra.mxu0 0
    %1460 = vmatprep.subr.bf16.mxu0 0
    %1461 = vmatpush1.bf16.msra.mxu0 0
    %1462 = vmatprep.subr.bf16.mxu0 0
    %1463 = vmatpush1.bf16.msra.mxu0 0
    %1464 = vmatprep.subr.bf16.mxu0 0
    %1465 = vmatpush1.bf16.msra.mxu0 0
    %1466 = vmatprep.subr.bf16.mxu0 0
    %1467 = vmatpush1.bf16.msra.mxu0 0
    %1468 = vmatprep.subr.bf16.mxu0 0
    %1469 = vmatpush1.bf16.msra.mxu0 0
    %1470 = vmatprep.subr.bf16.mxu0 0
    %1471 = vmatpush1.bf16.msra.mxu0 0
    %1472 = vmatprep.mubr.bf16.mxu0 0
    %1473 = vmatmul.mubr.bf16.gmra.mrb[0].mxu0 %v1438
    %v1474 = vpop.f32.mrb[0].mxu0
    %v1475 = vadd.f32 0.0, %v1474
    %v1476 = vpop.f32.mrb[0].mxu0
    %v1477 = vpop.f32.mrb[0].mxu0
    %v1478 = vpop.f32.mrb[0].mxu0
    %1479 = vdwg.mxu0
    %v1480 = vadd.f32 %v1424, %v1475
    %v1481 = vxor.u32 %v1480, 2147483648
    %v1482 = vmul.f32 %v1481, 1.442695
    %v1483 = vpow.pop %v1482
    %v1484 = vadd.f32 %v1483, 1.0
    %v1485 = vrcp.pop %v1484
    %v1486 = vmul.f32 1.0, %v1485
    %v1487 = vtanh.pop %v1480
    %v1488 = vmul.f32 %v1486, %v1412
    %1490 = vrot.lane.b32.xlu0 %v1487, 96
    %v1491 = vpop.permute.xlu0 %1490
    %v1493 = vmul.f32 %v1486, %v1491
    %1495 = vrot.lane.b32.xlu0 %v1493, 16
    %v1496 = vpop.permute.xlu0 %1495
    %v1498 = vadd.f32 %v1488, %v1496
    %v1499 = vtanh.pop %v1498
    %1501 = vrot.lane.b32.xlu0 %v1499, 32
    %v1502 = vpop.permute.xlu0 %1501
    %v1504 = vmul.f32 %v1486, %v1502
    %1506 = vrot.lane.b32.xlu0 %v1504, 80
    %v1507 = vpop.permute.xlu0 %1506
    %1509 = vst.msk [vmem:[%s711] sm:$0xff] %vm104, %v1507
    %v1510 = vld [vmem:[%s713] sm:$0xff]
    %v1511 = vpack.c.bf16 %v1504, %v1504
    %v1512 = vld [vmem:[#allocation6] sm:$0xf]
    %v1513 = vld [vmem:[#allocation6 + $0x4] sm:$0xf]
    %1515 = vrot.lane.b32.xlu0 %v1511, 80
    %v1516 = vpop.permute.xlu0 %1515
    %v1519 = vunpack.c.l.b16 %v1512
    %v1520 = vunpack.c.l.b16 %v1513
    %v1521 = vpack.c.b16 %v1520, %v1519
    %v1524 = vsel %vm104, %v1516, 0
    %1526 = vmatprep.subr.bf16.mxu0 0
    %1527 = vmatpush1.bf16.msra.mxu0 %v1521
    %1528 = vmatprep.subr.bf16.mxu0 0
    %1529 = vmatpush1.bf16.msra.mxu0 0
    %1530 = vmatprep.subr.bf16.mxu0 0
    %1531 = vmatpush1.bf16.msra.mxu0 0
    %1532 = vmatprep.subr.bf16.mxu0 0
    %1533 = vmatpush1.bf16.msra.mxu0 0
    %1534 = vmatprep.subr.bf16.mxu0 0
    %1535 = vmatpush1.bf16.msra.mxu0 0
    %1536 = vmatprep.subr.bf16.mxu0 0
    %1537 = vmatpush1.bf16.msra.mxu0 0
    %1538 = vmatprep.subr.bf16.mxu0 0
    %1539 = vmatpush1.bf16.msra.mxu0 0
    %1540 = vmatprep.subr.bf16.mxu0 0
    %1541 = vmatpush1.bf16.msra.mxu0 0
    %1542 = vmatprep.subr.bf16.mxu0 0
    %1543 = vmatpush1.bf16.msra.mxu0 0
    %1544 = vmatprep.subr.bf16.mxu0 0
    %1545 = vmatpush1.bf16.msra.mxu0 0
    %1546 = vmatprep.subr.bf16.mxu0 0
    %1547 = vmatpush1.bf16.msra.mxu0 0
    %1548 = vmatprep.subr.bf16.mxu0 0
    %1549 = vmatpush1.bf16.msra.mxu0 0
    %1550 = vmatprep.subr.bf16.mxu0 0
    %1551 = vmatpush1.bf16.msra.mxu0 0
    %1552 = vmatprep.subr.bf16.mxu0 0
    %1553 = vmatpush1.bf16.msra.mxu0 0
    %1554 = vmatprep.subr.bf16.mxu0 0
    %1555 = vmatpush1.bf16.msra.mxu0 0
    %1556 = vmatprep.subr.bf16.mxu0 0
    %1557 = vmatpush1.bf16.msra.mxu0 0
    %1558 = vmatprep.mubr.bf16.mxu0 0
    %1559 = vmatmul.mubr.bf16.gmra.mrb[0].mxu0 %v1524
    %v1560 = vpop.f32.mrb[0].mxu0
    %v1561 = vadd.f32 0.0, %v1560
    %v1562 = vpop.f32.mrb[0].mxu0
    %v1563 = vpop.f32.mrb[0].mxu0
    %v1564 = vpop.f32.mrb[0].mxu0
    %1565 = vdwg.mxu0
    %v1566 = vadd.f32 %v1510, %v1561
    %v1567 = vxor.u32 %v1566, 2147483648
    %v1568 = vmul.f32 %v1567, 1.442695
    %v1569 = vpow.pop %v1568
    %v1570 = vadd.f32 %v1569, 1.0
    %v1571 = vrcp.pop %v1570
    %v1572 = vmul.f32 1.0, %v1571
    %v1573 = vtanh.pop %v1566
    %v1574 = vmul.f32 %v1572, %v1498
    %1576 = vrot.lane.b32.xlu0 %v1573, 96
    %v1577 = vpop.permute.xlu0 %1576
    %v1579 = vmul.f32 %v1572, %v1577
    %1581 = vrot.lane.b32.xlu0 %v1579, 16
    %v1582 = vpop.permute.xlu0 %1581
    %v1584 = vadd.f32 %v1574, %v1582
    %v1585 = vtanh.pop %v1584
    %1587 = vrot.lane.b32.xlu0 %v1585, 32
    %v1588 = vpop.permute.xlu0 %1587
    %v1590 = vmul.f32 %v1572, %v1588
    %1592 = vrot.lane.b32.xlu0 %v1590, 80
    %v1593 = vpop.permute.xlu0 %1592
    %1595 = vst.msk [vmem:[%s799] sm:$0xff] %vm104, %v1593
    %v1596 = vld [vmem:[%s801] sm:$0xff]
    %v1597 = vpack.c.bf16 %v1590, %v1590
    %v1598 = vld [vmem:[#allocation6] sm:$0xf]
    %v1599 = vld [vmem:[#allocation6 + $0x4] sm:$0xf]
    %1601 = vrot.lane.b32.xlu0 %v1597, 80
    %v1602 = vpop.permute.xlu0 %1601
    %v1605 = vunpack.c.l.b16 %v1598
    %v1606 = vunpack.c.l.b16 %v1599
    %v1607 = vpack.c.b16 %v1606, %v1605
    %v1610 = vsel %vm104, %v1602, 0
    %1612 = vmatprep.subr.bf16.mxu0 0
    %1613 = vmatpush1.bf16.msra.mxu0 %v1607
    %1614 = vmatprep.subr.bf16.mxu0 0
    %1615 = vmatpush1.bf16.msra.mxu0 0
    %1616 = vmatprep.subr.bf16.mxu0 0
    %1617 = vmatpush1.bf16.msra.mxu0 0
    %1618 = vmatprep.subr.bf16.mxu0 0
    %1619 = vmatpush1.bf16.msra.mxu0 0
    %1620 = vmatprep.subr.bf16.mxu0 0
    %1621 = vmatpush1.bf16.msra.mxu0 0
    %1622 = vmatprep.subr.bf16.mxu0 0
    %1623 = vmatpush1.bf16.msra.mxu0 0
    %1624 = vmatprep.subr.bf16.mxu0 0
    %1625 = vmatpush1.bf16.msra.mxu0 0
    %1626 = vmatprep.subr.bf16.mxu0 0
    %1627 = vmatpush1.bf16.msra.mxu0 0
    %1628 = vmatprep.subr.bf16.mxu0 0
    %1629 = vmatpush1.bf16.msra.mxu0 0
    %1630 = vmatprep.subr.bf16.mxu0 0
    %1631 = vmatpush1.bf16.msra.mxu0 0
    %1632 = vmatprep.subr.bf16.mxu0 0
    %1633 = vmatpush1.bf16.msra.mxu0 0
    %1634 = vmatprep.subr.bf16.mxu0 0
    %1635 = vmatpush1.bf16.msra.mxu0 0
    %1636 = vmatprep.subr.bf16.mxu0 0
    %1637 = vmatpush1.bf16.msra.mxu0 0
    %1638 = vmatprep.subr.bf16.mxu0 0
    %1639 = vmatpush1.bf16.msra.mxu0 0
    %1640 = vmatprep.subr.bf16.mxu0 0
    %1641 = vmatpush1.bf16.msra.mxu0 0
    %1642 = vmatprep.subr.bf16.mxu0 0
    %1643 = vmatpush1.bf16.msra.mxu0 0
    %1644 = vmatprep.mubr.bf16.mxu0 0
    %1645 = vmatmul.mubr.bf16.gmra.mrb[0].mxu0 %v1610
    %v1646 = vpop.f32.mrb[0].mxu0
    %v1647 = vadd.f32 0.0, %v1646
    %v1648 = vpop.f32.mrb[0].mxu0
    %v1649 = vpop.f32.mrb[0].mxu0
    %v1650 = vpop.f32.mrb[0].mxu0
    %1651 = vdwg.mxu0
    %v1652 = vadd.f32 %v1596, %v1647
    %v1653 = vxor.u32 %v1652, 2147483648
    %v1654 = vmul.f32 %v1653, 1.442695
    %v1655 = vpow.pop %v1654
    %v1656 = vadd.f32 %v1655, 1.0
    %v1657 = vrcp.pop %v1656
    %v1658 = vmul.f32 1.0, %v1657
    %v1659 = vtanh.pop %v1652
    %v1660 = vmul.f32 %v1658, %v1584
    %1662 = vrot.lane.b32.xlu0 %v1659, 96
    %v1663 = vpop.permute.xlu0 %1662
    %v1665 = vmul.f32 %v1658, %v1663
    %1667 = vrot.lane.b32.xlu0 %v1665, 16
    %v1668 = vpop.permute.xlu0 %1667
    %v1670 = vadd.f32 %v1660, %v1668
    %v1671 = vtanh.pop %v1670
    %1673 = vrot.lane.b32.xlu0 %v1671, 32
    %v1674 = vpop.permute.xlu0 %1673
    %v1676 = vmul.f32 %v1658, %v1674
    %1678 = vrot.lane.b32.xlu0 %v1676, 80
    %v1679 = vpop.permute.xlu0 %1678
    %1681 = vst.msk [vmem:[%s887] sm:$0xff] %vm104, %v1679
    %v1682 = vld [vmem:[#allocation3] sm:$0xff]
    %v1683 = vld [vmem:[#allocation3 + $0x8] sm:$0xff]
    %v1684 = vld [vmem:[#allocation3 + $0x10] sm:$0xff]
    %v1685 = vld [vmem:[#allocation3 + $0x18] sm:$0xff]
    %v1686 = vld [vmem:[#allocation3 + $0x20] sm:$0xff]
    %v1687 = vld [vmem:[#allocation3 + $0x28] sm:$0xff]
    %v1688 = vld [vmem:[#allocation3 + $0x30] sm:$0xff]
    %v1689 = vld [vmem:[#allocation3 + $0x38] sm:$0xff]
    %v1690 = vpack.c.bf16 %v1683, %v1682
    %v1691 = vpack.c.bf16 %v1685, %v1684
    %v1692 = vpack.c.bf16 %v1687, %v1686
    %v1693 = vpack.c.bf16 %v1689, %v1688
    %v1694 = vld [vmem:[%s7] sm:$0xf]
    %v1695 = vld [vmem:[%s7 + $0x4] sm:$0xf]
    %v1696 = vld [vmem:[%s8] sm:$0x1]
    %v1698 = vlaneseq
    %v1699 = vshrl.u32 %v1698, 7
    %v1700 = vsub.s32 0, %v1699
    %v1701 = vrot.slane %v1696, %v1700
    %v1705 = vunpack.c.l.b16 %v1694
    %v1706 = vunpack.c.l.b16 %v1695
    %v1707 = vpack.c.b16 %v1706, %v1705
    %v1710 = vsel %vm104, %v1690, 0
    %v1713 = vsel %vm104, %v1691, 0
    %v1716 = vsel %vm104, %v1692, 0
    %v1719 = vsel %vm104, %v1693, 0
    %1721 = vmatprep.subr.bf16.mxu0 0
    %1722 = vmatpush1.bf16.msra.mxu0 %v1707
    %1723 = vmatprep.subr.bf16.mxu0 0
    %1724 = vmatpush1.bf16.msra.mxu0 0
    %1725 = vmatprep.subr.bf16.mxu0 0
    %1726 = vmatpush1.bf16.msra.mxu0 0
    %1727 = vmatprep.subr.bf16.mxu0 0
    %1728 = vmatpush1.bf16.msra.mxu0 0
    %1729 = vmatprep.subr.bf16.mxu0 0
    %1730 = vmatpush1.bf16.msra.mxu0 0
    %1731 = vmatprep.subr.bf16.mxu0 0
    %1732 = vmatpush1.bf16.msra.mxu0 0
    %1733 = vmatprep.subr.bf16.mxu0 0
    %1734 = vmatpush1.bf16.msra.mxu0 0
    %1735 = vmatprep.subr.bf16.mxu0 0
    %1736 = vmatpush1.bf16.msra.mxu0 0
    %1737 = vmatprep.subr.bf16.mxu0 0
    %1738 = vmatpush1.bf16.msra.mxu0 0
    %1739 = vmatprep.subr.bf16.mxu0 0
    %1740 = vmatpush1.bf16.msra.mxu0 0
    %1741 = vmatprep.subr.bf16.mxu0 0
    %1742 = vmatpush1.bf16.msra.mxu0 0
    %1743 = vmatprep.subr.bf16.mxu0 0
    %1744 = vmatpush1.bf16.msra.mxu0 0
    %1745 = vmatprep.subr.bf16.mxu0 0
    %1746 = vmatpush1.bf16.msra.mxu0 0
    %1747 = vmatprep.subr.bf16.mxu0 0
    %1748 = vmatpush1.bf16.msra.mxu0 0
    %1749 = vmatprep.subr.bf16.mxu0 0
    %1750 = vmatpush1.bf16.msra.mxu0 0
    %1751 = vmatprep.subr.bf16.mxu0 0
    %1752 = vmatpush1.bf16.msra.mxu0 0
    %1753 = vmatprep.mubr.bf16.mxu0 0
    %1754 = vmatmul.mubr.bf16.gmra.mrb[0].mxu0 %v1710
    %v1755 = vpop.f32.mrb[0].mxu0
    %v1756 = vadd.f32 %v1701, %v1755
    %v1757 = vpop.f32.mrb[0].mxu0
    %v1758 = vpop.f32.mrb[0].mxu0
    %v1759 = vadd.f32 %v1701, %v1758
    %v1760 = vpop.f32.mrb[0].mxu0
    %1761 = vmatprep.mubr.bf16.mxu0 0
    %1762 = vmatmul.mubr.bf16.gmra.mrb[0].mxu0 %v1713
    %v1763 = vpop.f32.mrb[0].mxu0
    %v1764 = vadd.f32 %v1701, %v1763
    %v1765 = vpop.f32.mrb[0].mxu0
    %v1766 = vpop.f32.mrb[0].mxu0
    %v1767 = vadd.f32 %v1701, %v1766
    %v1768 = vpop.f32.mrb[0].mxu0
    %1769 = vmatprep.mubr.bf16.mxu0 0
    %1770 = vmatmul.mubr.bf16.gmra.mrb[0].mxu0 %v1716
    %v1771 = vpop.f32.mrb[0].mxu0
    %v1772 = vadd.f32 %v1701, %v1771
    %v1773 = vpop.f32.mrb[0].mxu0
    %v1774 = vpop.f32.mrb[0].mxu0
    %v1775 = vadd.f32 %v1701, %v1774
    %v1776 = vpop.f32.mrb[0].mxu0
    %1777 = vmatprep.mubr.bf16.mxu0 0
    %1778 = vmatmul.mubr.bf16.gmra.mrb[0].mxu0 %v1719
    %v1779 = vpop.f32.mrb[0].mxu0
    %v1780 = vadd.f32 %v1701, %v1779
    %v1781 = vpop.f32.mrb[0].mxu0
    %v1782 = vpop.f32.mrb[0].mxu0
    %v1783 = vadd.f32 %v1701, %v1782
    %v1784 = vpop.f32.mrb[0].mxu0
    %1785 = vdwg.mxu0
    %vm1786 = vcmask 31744
    %1787 = vst.msk [vmem:[%s9] sm:$0xff] %vm1786, %v1756
    %1788 = vst.msk [vmem:[%s9 + $0x8] sm:$0xff] %vm1786, %v1759
    %1789 = vst.msk [vmem:[%s9 + $0x10] sm:$0xff] %vm1786, %v1764
    %1790 = vst.msk [vmem:[%s9 + $0x18] sm:$0xff] %vm1786, %v1767
    %1791 = vst.msk [vmem:[%s9 + $0x20] sm:$0xff] %vm1786, %v1772
    %1792 = vst.msk [vmem:[%s9 + $0x28] sm:$0xff] %vm1786, %v1775
    %1793 = vst.msk [vmem:[%s9 + $0x30] sm:$0xff] %vm1786, %v1780
    %1794 = vst.msk [vmem:[%s9 + $0x38] sm:$0xff] %vm1786, %v1783
    // Predicated region
    $region46: #{tpu_custom_call.1} parent=1 // pred_check
      _
    $region47: #{tpu_custom_call.1} parent=1 // pred_check_branch
      %1796 = sbr.rel (0) target = $region49
    $region48: #{tpu_custom_call.1} parent=1 // pred_region
      _
    $region49: #{tpu_custom_call.1} parent=1 // pred_fallthru
      _
    // Predicated region
    $region50: #{tpu_custom_call.1} parent=1 // pred_check
      _
    $region51: #{tpu_custom_call.1} parent=1 // pred_check_branch
      %1798 = sbr.rel (0) target = $region53
    $region52: #{tpu_custom_call.1} parent=1 // pred_region
      _
    $region53: #{tpu_custom_call.1} parent=1 // pred_fallthru
      _
    %1799 = vsyncpa [#allocation5], 1
    %1800 = vsyncpa [#allocation7], 1

</llo_original>
